<compile_context>
chip_gen: v7x
topology: tpu7x:2x2x1
jax: 0.10.0
libtpu: 0.0.40
codegen_flags: <defaults>
</compile_context>

<pallas_src>
import jax
import jax.numpy as jnp
from jax.experimental import pallas as pl
from jax.experimental.pallas import tpu as pltpu

NUM_ATTRIBUTES = 40
OUT_PAD = 128              # lane-dense padded classifier width
FEATURES_IN = 512          # 512 * 1 * 1 from the base model
HIDDEN = 1024
EPS = 1e-5                 # InstanceNorm1d default eps
LEAKY_SLOPE = 0.01         # F.leaky_relu default negative_slope
NEG_PAD = -1e30            # bias value for padded logit columns (exp -> 0)
MAX_TB = 1024              # max batch tile (rows)
VMEM_LIMIT = 48 * 1024 * 1024   # explicit scoped-VMEM limit (safe on v5e..v7x)


def _round_up(x, m):
    return ((x + m - 1) // m) * m


def _cdiv(a, b):
    return (a + b - 1) // b


def _compute_tiling(batch):
    """Grid-first tiling: bounded padding waste, >=2 (even) steps on big batches."""
    bp16 = _round_up(max(batch, 1), 16)
    grid = _cdiv(bp16, MAX_TB)
    if batch > 64:
        grid = max(grid, 2)          # use both v7x TensorCores
        if grid % 2:
            grid += 1                # balanced megacore split
    tb = _round_up(_cdiv(bp16, grid), 16)
    bp = grid * tb
    return tb, bp, grid


def classifier_kernel(x_ref, w1_ref, b1_ref, w2_ref, b2_ref, o_ref):
    # x_ref:  (TB, 512)  bf16      w1_ref: (512, 1024) bf16   b1_ref: (1, 1024) f32
    # w2_ref: (1024, 128) bf16     b2_ref: (1, 128)    f32    o_ref:  (TB, 128) bf16
    x = x_ref[...]                                        # bf16

    # dense1: (TB, 512) @ (512, 1024) -> f32 accumulate, + f32 bias
    h = jnp.dot(x, w1_ref[...], preferred_element_type=jnp.float32) + b1_ref[...]

    # InstanceNorm1d(1024) on 2-D input == per-row normalization over the 1024
    # features (biased variance, eps=1e-5, no affine).  Two-pass variance.
    # TODO(synk): InstanceNorm1d on a 2-D tensor is version-dependent in
    # PyTorch; per-row normalization over features is assumed here.
    mean = jnp.sum(h, axis=1, keepdims=True) * (1.0 / HIDDEN)
    d = h - mean
    var = jnp.sum(d * d, axis=1, keepdims=True) * (1.0 / HIDDEN)
    h = d * jax.lax.rsqrt(var + EPS)

    # leaky_relu (negative_slope = 0.01), f32
    h = jnp.where(h >= 0.0, h, LEAKY_SLOPE * h)

    # classifier: (TB, 1024) @ (1024, 128) + bias.  Padded columns have zero
    # weights and a -1e30 bias, so they vanish in the softmax below.
    logits = jnp.dot(h.astype(jnp.bfloat16), w2_ref[...],
                     preferred_element_type=jnp.float32) + b2_ref[...]

    # softmax along dim=1 (numerically stable); padded lanes -> exp(-huge) = 0.
    m = jnp.max(logits, axis=1, keepdims=True)
    e = jnp.exp(logits - m)
    denom = jnp.sum(e, axis=1, keepdims=True)
    o_ref[...] = (e * pl.reciprocal(denom, approx=True)).astype(o_ref.dtype)


def pack_params(w1, b1, w2, b2):
    """One-time packing of weights (bf16 matmul operands, 128-wide classifier)."""
    w1_bf16 = w1.astype(jnp.bfloat16)                                   # (512, 1024)
    b1_f32 = b1.reshape(1, HIDDEN).astype(jnp.float32)                  # (1, 1024)
    w2_pad = jnp.zeros((HIDDEN, OUT_PAD), jnp.bfloat16)
    w2_pad = w2_pad.at[:, :NUM_ATTRIBUTES].set(w2.astype(jnp.bfloat16)) # (1024, 128)
    b2_pad = jnp.full((1, OUT_PAD), NEG_PAD, jnp.float32)
    b2_pad = b2_pad.at[:, :NUM_ATTRIBUTES].set(
        b2.reshape(1, NUM_ATTRIBUTES).astype(jnp.float32))              # (1, 128)
    return w1_bf16, b1_f32, w2_pad, b2_pad


def classifier_forward(x_nchw, w1_bf16, b1_f32, w2_pad, b2_pad):
    # TODO(synk): `base_model` is an arbitrary module passed to __init__; it is
    # treated as identity here (input is already the (B, 512, 1, 1) feature map).
    feats = x_nchw.reshape(x_nchw.shape[0], -1).astype(jnp.bfloat16)  # flatten, bf16
    batch = feats.shape[0]

    tb, bp, grid = _compute_tiling(batch)
    if bp != batch:
        feats = jnp.pad(feats, ((0, bp - batch), (0, 0)))

    out = pl.pallas_call(
        classifier_kernel,
        out_shape=jax.ShapeDtypeStruct((bp, OUT_PAD), jnp.bfloat16),
        grid_spec=pltpu.PrefetchScalarGridSpec(
            num_scalar_prefetch=0,
            grid=(grid,),
            in_specs=[
                pl.BlockSpec((tb, FEATURES_IN), lambda i: (i, 0)),      # x tile
                pl.BlockSpec((FEATURES_IN, HIDDEN), lambda i: (0, 0)),  # W1 resident
                pl.BlockSpec((1, HIDDEN), lambda i: (0, 0)),            # b1 resident
                pl.BlockSpec((HIDDEN, OUT_PAD), lambda i: (0, 0)),      # W2 resident
                pl.BlockSpec((1, OUT_PAD), lambda i: (0, 0)),           # b2 resident
            ],
            out_specs=pl.BlockSpec((tb, OUT_PAD), lambda i: (i, 0)),
        ),
        compiler_params=pltpu.CompilerParams(
            dimension_semantics=("parallel",),
            vmem_limit_bytes=VMEM_LIMIT),
    )(feats, w1_bf16, b1_f32, w2_pad, b2_pad)

    return out[:batch, :NUM_ATTRIBUTES].astype(jnp.float32)


def init_params(key):
    """Deterministic init matching nn.Linear shapes (uniform +-1/sqrt(fan_in))."""
    k1, k2, k3, k4 = jax.random.split(key, 4)
    bound1 = 1.0 / (FEATURES_IN ** 0.5)
    bound2 = 1.0 / (HIDDEN ** 0.5)
    # stored transposed: (in_features, out_features)
    w1 = jax.random.uniform(k1, (FEATURES_IN, HIDDEN), jnp.float32, -bound1, bound1)
    b1 = jax.random.uniform(k2, (1, HIDDEN), jnp.float32, -bound1, bound1)
    w2 = jax.random.uniform(k3, (HIDDEN, NUM_ATTRIBUTES), jnp.float32, -bound2, bound2)
    b2 = jax.random.uniform(k4, (1, NUM_ATTRIBUTES), jnp.float32, -bound2, bound2)
    return w1, b1, w2, b2


def reference_forward(x_nchw, w1, b1, w2, b2):
    """Pure-JAX f32 reference for correctness checking."""
    feats = x_nchw.reshape(x_nchw.shape[0], -1).astype(jnp.float32)
    h = feats @ w1 + b1
    mean = jnp.mean(h, axis=1, keepdims=True)
    var = jnp.mean(jnp.square(h - mean), axis=1, keepdims=True)
    h = (h - mean) / jnp.sqrt(var + EPS)
    h = jnp.where(h >= 0.0, h, LEAKY_SLOPE * h)
    logits = h @ w2 + b2
    return jax.nn.softmax(logits, axis=1)


if __name__ == "__main__":
    key = jax.random.PRNGKey(0)
    k_x, k_p = jax.random.split(key)

    batch = 2
    # Output of the base model: (B, 512, 1, 1) NCHW feature map.
    x = jax.random.normal(k_x, (batch, FEATURES_IN, 1, 1), dtype=jnp.float32)
    w1, b1, w2, b2 = init_params(k_p)

    packed = pack_params(w1, b1, w2, b2)          # one-time, outside the jit path
    out = jax.jit(classifier_forward)(x, *packed)
    out = jax.block_until_ready(out)

    ref = reference_forward(x, w1, b1, w2, b2)
    assert out.shape == (batch, NUM_ATTRIBUTES)
    assert bool(jnp.all(jnp.isfinite(out)))
    # rows of a softmax must sum to ~1 (bf16 output + approx reciprocal -> loose atol)
    assert bool(jnp.allclose(jnp.sum(out, axis=1), 1.0, atol=1e-2))
    # bf16 matmul operands / bf16 output + approx reciprocal -> loosened tolerances
    assert bool(jnp.allclose(out, ref, atol=5e-3, rtol=5e-2))

    print("KERNEL_OK")
</pallas_src>

<mosaic_0001>
module attributes {stable_mosaic.version = 11 : i64} {
  func.func @classifier_kernel(%arg0: i32, %arg1: memref<16x512xbf16, #tpu.memory_space<vmem>>, %arg2: memref<512x1024xbf16, #tpu.memory_space<vmem>>, %arg3: memref<1x1024xf32, #tpu.memory_space<vmem>>, %arg4: memref<1024x128xbf16, #tpu.memory_space<vmem>>, %arg5: memref<1x128xf32, #tpu.memory_space<vmem>>, %arg6: memref<16x128xbf16, #tpu.memory_space<vmem>>) attributes {dimension_semantics = [#tpu.dimension_semantics<parallel>], iteration_bounds = array<i64: 1>, scalar_prefetch = 0 : i64, scratch_operands = 0 : i64, tpu.core_type = #tpu.core_type<tc>, window_params = [{transform_indices = @transform_0, window_bounds = array<i64: 16, 512>}, {pipeline_mode = #tpu.pipeline_mode<synchronous>, transform_indices = @transform_1, window_bounds = array<i64: 512, 1024>}, {pipeline_mode = #tpu.pipeline_mode<synchronous>, transform_indices = @transform_2, window_bounds = array<i64: 1, 1024>}, {pipeline_mode = #tpu.pipeline_mode<synchronous>, transform_indices = @transform_3, window_bounds = array<i64: 1024, 128>}, {pipeline_mode = #tpu.pipeline_mode<synchronous>, transform_indices = @transform_4, window_bounds = array<i64: 1, 128>}, {transform_indices = @transform_5, window_bounds = array<i64: 16, 128>}]} {
    %c0 = arith.constant 0 : index
    %c0_0 = arith.constant 0 : index
    %0 = vector.load %arg1[%c0, %c0_0] : memref<16x512xbf16, #tpu.memory_space<vmem>>, vector<16x512xbf16>
    %c0_1 = arith.constant 0 : index
    %c0_2 = arith.constant 0 : index
    %1 = vector.load %arg2[%c0_1, %c0_2] : memref<512x1024xbf16, #tpu.memory_space<vmem>>, vector<512x1024xbf16>
    %cst = arith.constant dense<0.000000e+00> : vector<16x1024xf32>
    %2 = tpu.matmul %0, %1, %cst {dimension_numbers = #tpu.dot_dimension_numbers<[1], [0], [0], [1], [0, 0, 1, 1], [], []>} : vector<16x512xbf16>, vector<512x1024xbf16>, vector<16x1024xf32> -> vector<16x1024xf32>
    %c0_3 = arith.constant 0 : index
    %c0_4 = arith.constant 0 : index
    %3 = vector.load %arg3[%c0_3, %c0_4] : memref<1x1024xf32, #tpu.memory_space<vmem>>, vector<1x1024xf32>
    %4 = vector.broadcast %3 : vector<1x1024xf32> to vector<16x1024xf32>
    %5 = arith.addf %2, %4 : vector<16x1024xf32>
    %cst_5 = arith.constant dense<0.000000e+00> : vector<16xf32>
    %6 = vector.multi_reduction <add>, %5, %cst_5 [1] : vector<16x1024xf32> to vector<16xf32>
    %7 = vector.shape_cast %6 : vector<16xf32> to vector<16x1xf32>
    %cst_6 = arith.constant 9.765625E-4 : f32
    %8 = vector.broadcast %cst_6 : f32 to vector<16x1xf32>
    %9 = arith.mulf %7, %8 : vector<16x1xf32>
    %10 = vector.broadcast %9 : vector<16x1xf32> to vector<16x1024xf32>
    %11 = arith.subf %5, %10 : vector<16x1024xf32>
    %12 = arith.mulf %11, %11 : vector<16x1024xf32>
    %cst_7 = arith.constant dense<0.000000e+00> : vector<16xf32>
    %13 = vector.multi_reduction <add>, %12, %cst_7 [1] : vector<16x1024xf32> to vector<16xf32>
    %14 = vector.shape_cast %13 : vector<16xf32> to vector<16x1xf32>
    %cst_8 = arith.constant 9.765625E-4 : f32
    %15 = vector.broadcast %cst_8 : f32 to vector<16x1xf32>
    %16 = arith.mulf %14, %15 : vector<16x1xf32>
    %cst_9 = arith.constant 9.99999974E-6 : f32
    %17 = vector.broadcast %cst_9 : f32 to vector<16x1xf32>
    %18 = arith.addf %16, %17 : vector<16x1xf32>
    %19 = math.rsqrt %18 : vector<16x1xf32>
    %20 = vector.broadcast %19 : vector<16x1xf32> to vector<16x1024xf32>
    %21 = arith.mulf %11, %20 : vector<16x1024xf32>
    %cst_10 = arith.constant 0.000000e+00 : f32
    %22 = vector.broadcast %cst_10 : f32 to vector<16x1024xf32>
    %23 = arith.cmpf oge, %21, %22 : vector<16x1024xf32>
    %cst_11 = arith.constant 0.00999999977 : f32
    %24 = vector.broadcast %cst_11 : f32 to vector<16x1024xf32>
    %25 = arith.mulf %24, %21 : vector<16x1024xf32>
    %26 = arith.select %23, %21, %25 : vector<16x1024xi1>, vector<16x1024xf32>
    %27 = arith.truncf %26 : vector<16x1024xf32> to vector<16x1024xbf16>
    %c0_12 = arith.constant 0 : index
    %c0_13 = arith.constant 0 : index
    %28 = vector.load %arg4[%c0_12, %c0_13] : memref<1024x128xbf16, #tpu.memory_space<vmem>>, vector<1024x128xbf16>
    %cst_14 = arith.constant dense<0.000000e+00> : vector<16x128xf32>
    %29 = tpu.matmul %27, %28, %cst_14 {dimension_numbers = #tpu.dot_dimension_numbers<[1], [0], [0], [1], [0, 0, 1, 1], [], []>} : vector<16x1024xbf16>, vector<1024x128xbf16>, vector<16x128xf32> -> vector<16x128xf32>
    %c0_15 = arith.constant 0 : index
    %c0_16 = arith.constant 0 : index
    %30 = vector.load %arg5[%c0_15, %c0_16] : memref<1x128xf32, #tpu.memory_space<vmem>>, vector<1x128xf32>
    %31 = vector.broadcast %30 : vector<1x128xf32> to vector<16x128xf32>
    %32 = arith.addf %29, %31 : vector<16x128xf32>
    %cst_17 = arith.constant dense<0xFF800000> : vector<16xf32>
    %33 = vector.multi_reduction <maximumf>, %32, %cst_17 [1] : vector<16x128xf32> to vector<16xf32>
    %34 = vector.shape_cast %33 : vector<16xf32> to vector<16x1xf32>
    %35 = vector.broadcast %34 : vector<16x1xf32> to vector<16x128xf32>
    %36 = arith.subf %32, %35 : vector<16x128xf32>
    %37 = math.exp %36 : vector<16x128xf32>
    %cst_18 = arith.constant dense<0.000000e+00> : vector<16xf32>
    %38 = vector.multi_reduction <add>, %37, %cst_18 [1] : vector<16x128xf32> to vector<16xf32>
    %39 = vector.shape_cast %38 : vector<16xf32> to vector<16x1xf32>
    %40 = tpu.reciprocal %39 {approx = true} : vector<16x1xf32> -> vector<16x1xf32>
    %41 = vector.broadcast %40 : vector<16x1xf32> to vector<16x128xf32>
    %42 = arith.mulf %37, %41 : vector<16x128xf32>
    %43 = arith.truncf %42 : vector<16x128xf32> to vector<16x128xbf16>
    %c0_19 = arith.constant 0 : index
    %c0_20 = arith.constant 0 : index
    %44 = vector.load %arg6[%c0_19, %c0_20] : memref<16x128xbf16, #tpu.memory_space<vmem>>, vector<16x128xbf16>
    tpu.vector_store %arg6[%c0_19, %c0_20], %43 {strides = array<i32>} : memref<16x128xbf16, #tpu.memory_space<vmem>>, vector<16x128xbf16>,
    return
  }
  func.func @transform_0(%arg0: i32) -> (i32, i32) {
    %c0_i32 = arith.constant 0 : i32
    %c0_i32_0 = arith.constant 0 : i32
    return %arg0, %c0_i32 : i32, i32
  }
  func.func @transform_1(%arg0: i32) -> (i32, i32) {
    %c0_i32 = arith.constant 0 : i32
    %c0_i32_0 = arith.constant 0 : i32
    %c0_i32_1 = arith.constant 0 : i32
    return %c0_i32, %c0_i32_0 : i32, i32
  }
  func.func @transform_2(%arg0: i32) -> (i32, i32) {
    %c0_i32 = arith.constant 0 : i32
    %c0_i32_0 = arith.constant 0 : i32
    %c0_i32_1 = arith.constant 0 : i32
    return %c0_i32, %c0_i32_0 : i32, i32
  }
  func.func @transform_3(%arg0: i32) -> (i32, i32) {
    %c0_i32 = arith.constant 0 : i32
    %c0_i32_0 = arith.constant 0 : i32
    %c0_i32_1 = arith.constant 0 : i32
    return %c0_i32, %c0_i32_0 : i32, i32
  }
  func.func @transform_4(%arg0: i32) -> (i32, i32) {
    %c0_i32 = arith.constant 0 : i32
    %c0_i32_0 = arith.constant 0 : i32
    %c0_i32_1 = arith.constant 0 : i32
    return %c0_i32, %c0_i32_0 : i32, i32
  }
  func.func @transform_5(%arg0: i32) -> (i32, i32) {
    %c0_i32 = arith.constant 0 : i32
    %c0_i32_0 = arith.constant 0 : i32
    return %arg0, %c0_i32 : i32, i32
  }
}

</mosaic_0001>

<llo_original>
// kernel: classifier_forward.1
$region0: #{classifier_forward.1}
  #allocation0 [shape = 'u32[]', space=smem, size = 0x4, offset = 0x4, fixed_abs, tag = 'smem constant byte address 0x4 - core index']
  #allocation1 [shape = 'u32[144,128]{1,0:T(1,128)}', space=vmem, size = 0x12000, scoped, tag = 'internal scratch']
  %s0 = inlined_call_operand.vmem [shape: bf16[16,512], index: 0, kind: input, shape index: {}]
  %s1 = inlined_call_operand.hbm [shape: bf16[512,1024], index: 1, kind: input, shape index: {}]
  %s2 = inlined_call_operand.vmem [shape: f32[1,1024], index: 2, kind: input, shape index: {}]
  %s3 = inlined_call_operand.hbm [shape: bf16[1024,128], index: 3, kind: input, shape index: {}]
  %s4 = inlined_call_operand.vmem [shape: f32[1,128], index: 4, kind: input, shape index: {}]
  %s5 = inlined_call_operand.vmem [shape: bf16[16,128], index: 5, kind: output, shape index: {}]
  %s6 = sld [smem:[#allocation0]]
  $region38: #{classifier_forward.1} parent=0
    _
  %s8 = ssub.s32 1, %s6
  %s9 = scalar_select 0, %s8, %s6
  $region1: #{classifier_forward.1} parent=0
    #allocation2 [shape = 'u8[1048576]{0}', space=vmem, size = 0x100000, scoped, tag = 'input window, operand 1, single buffered']
    #allocation3 [shape = 's32[1]{0}', space=sflag, size = 0x4, scoped, tag = 'scoped memory for classifier_forward.1']
    #allocation4 [shape = 'u8[262144]{0}', space=vmem, size = 0x40000, scoped, tag = 'input window, operand 3, single buffered']
    #allocation5 [shape = 's32[1]{0}', space=sflag, size = 0x4, scoped, tag = 'scoped memory for classifier_forward.1']
    %10 = vsyncpa [#allocation3], 0
    %11 = vsyncpa [#allocation5], 0
    // Predicated region
    $region2: #{classifier_forward.1} parent=1 // pred_check
      _
    $region3: #{classifier_forward.1} parent=1 // pred_check_branch
      %13 = sbr.rel (0) target = $region5
    $region4: #{classifier_forward.1} parent=1 // pred_region
      _
    $region5: #{classifier_forward.1} parent=1 // pred_fallthru
      _
    // Predicated region
    $region6: #{classifier_forward.1} parent=1 // pred_check
      _
    $region7: #{classifier_forward.1} parent=1 // pred_check_branch
      %15 = sbr.rel (0) target = $region9
    $region8: #{classifier_forward.1} parent=1 // pred_region
      %s17 = ssub.s32 32768, 32768
      %18 = vsyncadd [#allocation3], %s17
      %s19 = sshll.u32 [#allocation2], 4
      %s20 = int_to_ptr.vmem [resolvable:$true] %s19
      %25 = dma.hbm_to_vmem [thread:$0]  %s1, 32768, %s20, [#allocation3], 512, 512, 32
    $region9: #{classifier_forward.1} parent=1 // pred_fallthru
      _
    // Predicated region
    $region10: #{classifier_forward.1} parent=1 // pred_check
      _
    $region11: #{classifier_forward.1} parent=1 // pred_check_branch
      %27 = sbr.rel (0) target = $region13
    $region12: #{classifier_forward.1} parent=1 // pred_region
      _
    $region13: #{classifier_forward.1} parent=1 // pred_fallthru
      _
    // Predicated region
    $region14: #{classifier_forward.1} parent=1 // pred_check
      _
    $region15: #{classifier_forward.1} parent=1 // pred_check_branch
      %29 = sbr.rel (0) target = $region17
    $region16: #{classifier_forward.1} parent=1 // pred_region
      %s31 = ssub.s32 8192, 8192
      %32 = vsyncadd [#allocation5], %s31
      %s33 = sshll.u32 [#allocation4], 4
      %s34 = int_to_ptr.vmem [resolvable:$true] %s33
      %39 = dma.hbm_to_vmem [thread:$0]  %s3, 8192, %s34, [#allocation5], 64, 64, 4
    $region17: #{classifier_forward.1} parent=1 // pred_fallthru
      _
    // Predicated region
    $region18: #{classifier_forward.1} parent=1 // pred_check
      _
    $region19: #{classifier_forward.1} parent=1 // pred_check_branch
      %41 = sbr.rel (0) target = $region21
    $region20: #{classifier_forward.1} parent=1 // pred_region
      _
    $region21: #{classifier_forward.1} parent=1 // pred_fallthru
      _
    // Predicated region
    $region22: #{classifier_forward.1} parent=1 // pred_check
      _
    $region23: #{classifier_forward.1} parent=1 // pred_check_branch
      %43 = sbr.rel (0) target = $region25
    $region24: #{classifier_forward.1} parent=1 // pred_region
      %44 = dma.done [#allocation3], 32768
    $region25: #{classifier_forward.1} parent=1 // pred_fallthru
      _
    // Predicated region
    $region26: #{classifier_forward.1} parent=1 // pred_check
      _
    $region27: #{classifier_forward.1} parent=1 // pred_check_branch
      %46 = sbr.rel (0) target = $region29
    $region28: #{classifier_forward.1} parent=1 // pred_region
      %47 = dma.done [#allocation5], 8192
    $region29: #{classifier_forward.1} parent=1 // pred_fallthru
      _
    %v49 = vld [vmem:[%s0] sm:$0xff]
    %v50 = vld [vmem:[%s0 + $0x8] sm:$0xff]
    %v51 = vld [vmem:[%s0 + $0x10] sm:$0xff]
    %v52 = vld [vmem:[%s0 + $0x18] sm:$0xff]
    %v53 = vld [vmem:[#allocation2] sm:$0xff]
    %v54 = vld [vmem:[#allocation2 + $0x8] sm:$0xff]
    %v55 = vld [vmem:[#allocation2 + $0x10] sm:$0xff]
    %v56 = vld [vmem:[#allocation2 + $0x18] sm:$0xff]
    %v57 = vld [vmem:[#allocation2 + $0x20] sm:$0xff]
    %v58 = vld [vmem:[#allocation2 + $0x28] sm:$0xff]
    %v59 = vld [vmem:[#allocation2 + $0x30] sm:$0xff]
    %v60 = vld [vmem:[#allocation2 + $0x38] sm:$0xff]
    %v61 = vld [vmem:[#allocation2 + $0x40] sm:$0xff]
    %v62 = vld [vmem:[#allocation2 + $0x48] sm:$0xff]
    %v63 = vld [vmem:[#allocation2 + $0x50] sm:$0xff]
    %v64 = vld [vmem:[#allocation2 + $0x58] sm:$0xff]
    %v65 = vld [vmem:[#allocation2 + $0x60] sm:$0xff]
    %v66 = vld [vmem:[#allocation2 + $0x68] sm:$0xff]
    %v67 = vld [vmem:[#allocation2 + $0x70] sm:$0xff]
    %v68 = vld [vmem:[#allocation2 + $0x78] sm:$0xff]
    %v69 = vld [vmem:[#allocation2 + $0x80] sm:$0xff]
    %v70 = vld [vmem:[#allocation2 + $0x88] sm:$0xff]
    %v71 = vld [vmem:[#allocation2 + $0x90] sm:$0xff]
    %v72 = vld [vmem:[#allocation2 + $0x98] sm:$0xff]
    %v73 = vld [vmem:[#allocation2 + $0xa0] sm:$0xff]
    %v74 = vld [vmem:[#allocation2 + $0xa8] sm:$0xff]
    %v75 = vld [vmem:[#allocation2 + $0xb0] sm:$0xff]
    %v76 = vld [vmem:[#allocation2 + $0xb8] sm:$0xff]
    %v77 = vld [vmem:[#allocation2 + $0xc0] sm:$0xff]
    %v78 = vld [vmem:[#allocation2 + $0xc8] sm:$0xff]
    %v79 = vld [vmem:[#allocation2 + $0xd0] sm:$0xff]
    %v80 = vld [vmem:[#allocation2 + $0xd8] sm:$0xff]
    %v81 = vld [vmem:[#allocation2 + $0xe0] sm:$0xff]
    %v82 = vld [vmem:[#allocation2 + $0xe8] sm:$0xff]
    %v83 = vld [vmem:[#allocation2 + $0xf0] sm:$0xff]
    %v84 = vld [vmem:[#allocation2 + $0xf8] sm:$0xff]
    %v85 = vld [vmem:[#allocation2 + $0x100] sm:$0xff]
    %v86 = vld [vmem:[#allocation2 + $0x108] sm:$0xff]
    %v87 = vld [vmem:[#allocation2 + $0x110] sm:$0xff]
    %v88 = vld [vmem:[#allocation2 + $0x118] sm:$0xff]
    %v89 = vld [vmem:[#allocation2 + $0x120] sm:$0xff]
    %v90 = vld [vmem:[#allocation2 + $0x128] sm:$0xff]
    %v91 = vld [vmem:[#allocation2 + $0x130] sm:$0xff]
    %v92 = vld [vmem:[#allocation2 + $0x138] sm:$0xff]
    %v93 = vld [vmem:[#allocation2 + $0x140] sm:$0xff]
    %v94 = vld [vmem:[#allocation2 + $0x148] sm:$0xff]
    %v95 = vld [vmem:[#allocation2 + $0x150] sm:$0xff]
    %v96 = vld [vmem:[#allocation2 + $0x158] sm:$0xff]
    %v97 = vld [vmem:[#allocation2 + $0x160] sm:$0xff]
    %v98 = vld [vmem:[#allocation2 + $0x168] sm:$0xff]
    %v99 = vld [vmem:[#allocation2 + $0x170] sm:$0xff]
    %v100 = vld [vmem:[#allocation2 + $0x178] sm:$0xff]
    %v101 = vld [vmem:[#allocation2 + $0x180] sm:$0xff]
    %v102 = vld [vmem:[#allocation2 + $0x188] sm:$0xff]
    %v103 = vld [vmem:[#allocation2 + $0x190] sm:$0xff]
    %v104 = vld [vmem:[#allocation2 + $0x198] sm:$0xff]
    %v105 = vld [vmem:[#allocation2 + $0x1a0] sm:$0xff]
    %v106 = vld [vmem:[#allocation2 + $0x1a8] sm:$0xff]
    %v107 = vld [vmem:[#allocation2 + $0x1b0] sm:$0xff]
    %v108 = vld [vmem:[#allocation2 + $0x1b8] sm:$0xff]
    %v109 = vld [vmem:[#allocation2 + $0x1c0] sm:$0xff]
    %v110 = vld [vmem:[#allocation2 + $0x1c8] sm:$0xff]
    %v111 = vld [vmem:[#allocation2 + $0x1d0] sm:$0xff]
    %v112 = vld [vmem:[#allocation2 + $0x1d8] sm:$0xff]
    %v113 = vld [vmem:[#allocation2 + $0x1e0] sm:$0xff]
    %v114 = vld [vmem:[#allocation2 + $0x1e8] sm:$0xff]
    %v115 = vld [vmem:[#allocation2 + $0x1f0] sm:$0xff]
    %v116 = vld [vmem:[#allocation2 + $0x1f8] sm:$0xff]
    %v117 = vld [vmem:[#allocation2 + $0x200] sm:$0xff]
    %v118 = vld [vmem:[#allocation2 + $0x208] sm:$0xff]
    %v119 = vld [vmem:[#allocation2 + $0x210] sm:$0xff]
    %v120 = vld [vmem:[#allocation2 + $0x218] sm:$0xff]
    %v121 = vld [vmem:[#allocation2 + $0x220] sm:$0xff]
    %v122 = vld [vmem:[#allocation2 + $0x228] sm:$0xff]
    %v123 = vld [vmem:[#allocation2 + $0x230] sm:$0xff]
    %v124 = vld [vmem:[#allocation2 + $0x238] sm:$0xff]
    %v125 = vld [vmem:[#allocation2 + $0x240] sm:$0xff]
    %v126 = vld [vmem:[#allocation2 + $0x248] sm:$0xff]
    %v127 = vld [vmem:[#allocation2 + $0x250] sm:$0xff]
    %v128 = vld [vmem:[#allocation2 + $0x258] sm:$0xff]
    %v129 = vld [vmem:[#allocation2 + $0x260] sm:$0xff]
    %v130 = vld [vmem:[#allocation2 + $0x268] sm:$0xff]
    %v131 = vld [vmem:[#allocation2 + $0x270] sm:$0xff]
    %v132 = vld [vmem:[#allocation2 + $0x278] sm:$0xff]
    %v133 = vld [vmem:[#allocation2 + $0x280] sm:$0xff]
    %v134 = vld [vmem:[#allocation2 + $0x288] sm:$0xff]
    %v135 = vld [vmem:[#allocation2 + $0x290] sm:$0xff]
    %v136 = vld [vmem:[#allocation2 + $0x298] sm:$0xff]
    %v137 = vld [vmem:[#allocation2 + $0x2a0] sm:$0xff]
    %v138 = vld [vmem:[#allocation2 + $0x2a8] sm:$0xff]
    %v139 = vld [vmem:[#allocation2 + $0x2b0] sm:$0xff]
    %v140 = vld [vmem:[#allocation2 + $0x2b8] sm:$0xff]
    %v141 = vld [vmem:[#allocation2 + $0x2c0] sm:$0xff]
    %v142 = vld [vmem:[#allocation2 + $0x2c8] sm:$0xff]
    %v143 = vld [vmem:[#allocation2 + $0x2d0] sm:$0xff]
    %v144 = vld [vmem:[#allocation2 + $0x2d8] sm:$0xff]
    %v145 = vld [vmem:[#allocation2 + $0x2e0] sm:$0xff]
    %v146 = vld [vmem:[#allocation2 + $0x2e8] sm:$0xff]
    %v147 = vld [vmem:[#allocation2 + $0x2f0] sm:$0xff]
    %v148 = vld [vmem:[#allocation2 + $0x2f8] sm:$0xff]
    %v149 = vld [vmem:[#allocation2 + $0x300] sm:$0xff]
    %v150 = vld [vmem:[#allocation2 + $0x308] sm:$0xff]
    %v151 = vld [vmem:[#allocation2 + $0x310] sm:$0xff]
    %v152 = vld [vmem:[#allocation2 + $0x318] sm:$0xff]
    %v153 = vld [vmem:[#allocation2 + $0x320] sm:$0xff]
    %v154 = vld [vmem:[#allocation2 + $0x328] sm:$0xff]
    %v155 = vld [vmem:[#allocation2 + $0x330] sm:$0xff]
    %v156 = vld [vmem:[#allocation2 + $0x338] sm:$0xff]
    %v157 = vld [vmem:[#allocation2 + $0x340] sm:$0xff]
    %v158 = vld [vmem:[#allocation2 + $0x348] sm:$0xff]
    %v159 = vld [vmem:[#allocation2 + $0x350] sm:$0xff]
    %v160 = vld [vmem:[#allocation2 + $0x358] sm:$0xff]
    %v161 = vld [vmem:[#allocation2 + $0x360] sm:$0xff]
    %v162 = vld [vmem:[#allocation2 + $0x368] sm:$0xff]
    %v163 = vld [vmem:[#allocation2 + $0x370] sm:$0xff]
    %v164 = vld [vmem:[#allocation2 + $0x378] sm:$0xff]
    %v165 = vld [vmem:[#allocation2 + $0x380] sm:$0xff]
    %v166 = vld [vmem:[#allocation2 + $0x388] sm:$0xff]
    %v167 = vld [vmem:[#allocation2 + $0x390] sm:$0xff]
    %v168 = vld [vmem:[#allocation2 + $0x398] sm:$0xff]
    %v169 = vld [vmem:[#allocation2 + $0x3a0] sm:$0xff]
    %v170 = vld [vmem:[#allocation2 + $0x3a8] sm:$0xff]
    %v171 = vld [vmem:[#allocation2 + $0x3b0] sm:$0xff]
    %v172 = vld [vmem:[#allocation2 + $0x3b8] sm:$0xff]
    %v173 = vld [vmem:[#allocation2 + $0x3c0] sm:$0xff]
    %v174 = vld [vmem:[#allocation2 + $0x3c8] sm:$0xff]
    %v175 = vld [vmem:[#allocation2 + $0x3d0] sm:$0xff]
    %v176 = vld [vmem:[#allocation2 + $0x3d8] sm:$0xff]
    %v177 = vld [vmem:[#allocation2 + $0x3e0] sm:$0xff]
    %v178 = vld [vmem:[#allocation2 + $0x3e8] sm:$0xff]
    %v179 = vld [vmem:[#allocation2 + $0x3f0] sm:$0xff]
    %v180 = vld [vmem:[#allocation2 + $0x3f8] sm:$0xff]
    %v181 = vld [vmem:[#allocation2 + $0x400] sm:$0xff]
    %v182 = vld [vmem:[#allocation2 + $0x408] sm:$0xff]
    %v183 = vld [vmem:[#allocation2 + $0x410] sm:$0xff]
    %v184 = vld [vmem:[#allocation2 + $0x418] sm:$0xff]
    %v185 = vld [vmem:[#allocation2 + $0x420] sm:$0xff]
    %v186 = vld [vmem:[#allocation2 + $0x428] sm:$0xff]
    %v187 = vld [vmem:[#allocation2 + $0x430] sm:$0xff]
    %v188 = vld [vmem:[#allocation2 + $0x438] sm:$0xff]
    %v189 = vld [vmem:[#allocation2 + $0x440] sm:$0xff]
    %v190 = vld [vmem:[#allocation2 + $0x448] sm:$0xff]
    %v191 = vld [vmem:[#allocation2 + $0x450] sm:$0xff]
    %v192 = vld [vmem:[#allocation2 + $0x458] sm:$0xff]
    %v193 = vld [vmem:[#allocation2 + $0x460] sm:$0xff]
    %v194 = vld [vmem:[#allocation2 + $0x468] sm:$0xff]
    %v195 = vld [vmem:[#allocation2 + $0x470] sm:$0xff]
    %v196 = vld [vmem:[#allocation2 + $0x478] sm:$0xff]
    %v197 = vld [vmem:[#allocation2 + $0x480] sm:$0xff]
    %v198 = vld [vmem:[#allocation2 + $0x488] sm:$0xff]
    %v199 = vld [vmem:[#allocation2 + $0x490] sm:$0xff]
    %v200 = vld [vmem:[#allocation2 + $0x498] sm:$0xff]
    %v201 = vld [vmem:[#allocation2 + $0x4a0] sm:$0xff]
    %v202 = vld [vmem:[#allocation2 + $0x4a8] sm:$0xff]
    %v203 = vld [vmem:[#allocation2 + $0x4b0] sm:$0xff]
    %v204 = vld [vmem:[#allocation2 + $0x4b8] sm:$0xff]
    %v205 = vld [vmem:[#allocation2 + $0x4c0] sm:$0xff]
    %v206 = vld [vmem:[#allocation2 + $0x4c8] sm:$0xff]
    %v207 = vld [vmem:[#allocation2 + $0x4d0] sm:$0xff]
    %v208 = vld [vmem:[#allocation2 + $0x4d8] sm:$0xff]
    %v209 = vld [vmem:[#allocation2 + $0x4e0] sm:$0xff]
    %v210 = vld [vmem:[#allocation2 + $0x4e8] sm:$0xff]
    %v211 = vld [vmem:[#allocation2 + $0x4f0] sm:$0xff]
    %v212 = vld [vmem:[#allocation2 + $0x4f8] sm:$0xff]
    %v213 = vld [vmem:[#allocation2 + $0x500] sm:$0xff]
    %v214 = vld [vmem:[#allocation2 + $0x508] sm:$0xff]
    %v215 = vld [vmem:[#allocation2 + $0x510] sm:$0xff]
    %v216 = vld [vmem:[#allocation2 + $0x518] sm:$0xff]
    %v217 = vld [vmem:[#allocation2 + $0x520] sm:$0xff]
    %v218 = vld [vmem:[#allocation2 + $0x528] sm:$0xff]
    %v219 = vld [vmem:[#allocation2 + $0x530] sm:$0xff]
    %v220 = vld [vmem:[#allocation2 + $0x538] sm:$0xff]
    %v221 = vld [vmem:[#allocation2 + $0x540] sm:$0xff]
    %v222 = vld [vmem:[#allocation2 + $0x548] sm:$0xff]
    %v223 = vld [vmem:[#allocation2 + $0x550] sm:$0xff]
    %v224 = vld [vmem:[#allocation2 + $0x558] sm:$0xff]
    %v225 = vld [vmem:[#allocation2 + $0x560] sm:$0xff]
    %v226 = vld [vmem:[#allocation2 + $0x568] sm:$0xff]
    %v227 = vld [vmem:[#allocation2 + $0x570] sm:$0xff]
    %v228 = vld [vmem:[#allocation2 + $0x578] sm:$0xff]
    %v229 = vld [vmem:[#allocation2 + $0x580] sm:$0xff]
    %v230 = vld [vmem:[#allocation2 + $0x588] sm:$0xff]
    %v231 = vld [vmem:[#allocation2 + $0x590] sm:$0xff]
    %v232 = vld [vmem:[#allocation2 + $0x598] sm:$0xff]
    %v233 = vld [vmem:[#allocation2 + $0x5a0] sm:$0xff]
    %v234 = vld [vmem:[#allocation2 + $0x5a8] sm:$0xff]
    %v235 = vld [vmem:[#allocation2 + $0x5b0] sm:$0xff]
    %v236 = vld [vmem:[#allocation2 + $0x5b8] sm:$0xff]
    %v237 = vld [vmem:[#allocation2 + $0x5c0] sm:$0xff]
    %v238 = vld [vmem:[#allocation2 + $0x5c8] sm:$0xff]
    %v239 = vld [vmem:[#allocation2 + $0x5d0] sm:$0xff]
    %v240 = vld [vmem:[#allocation2 + $0x5d8] sm:$0xff]
    %v241 = vld [vmem:[#allocation2 + $0x5e0] sm:$0xff]
    %v242 = vld [vmem:[#allocation2 + $0x5e8] sm:$0xff]
    %v243 = vld [vmem:[#allocation2 + $0x5f0] sm:$0xff]
    %v244 = vld [vmem:[#allocation2 + $0x5f8] sm:$0xff]
    %v245 = vld [vmem:[#allocation2 + $0x600] sm:$0xff]
    %v246 = vld [vmem:[#allocation2 + $0x608] sm:$0xff]
    %v247 = vld [vmem:[#allocation2 + $0x610] sm:$0xff]
    %v248 = vld [vmem:[#allocation2 + $0x618] sm:$0xff]
    %v249 = vld [vmem:[#allocation2 + $0x620] sm:$0xff]
    %v250 = vld [vmem:[#allocation2 + $0x628] sm:$0xff]
    %v251 = vld [vmem:[#allocation2 + $0x630] sm:$0xff]
    %v252 = vld [vmem:[#allocation2 + $0x638] sm:$0xff]
    %v253 = vld [vmem:[#allocation2 + $0x640] sm:$0xff]
    %v254 = vld [vmem:[#allocation2 + $0x648] sm:$0xff]
    %v255 = vld [vmem:[#allocation2 + $0x650] sm:$0xff]
    %v256 = vld [vmem:[#allocation2 + $0x658] sm:$0xff]
    %v257 = vld [vmem:[#allocation2 + $0x660] sm:$0xff]
    %v258 = vld [vmem:[#allocation2 + $0x668] sm:$0xff]
    %v259 = vld [vmem:[#allocation2 + $0x670] sm:$0xff]
    %v260 = vld [vmem:[#allocation2 + $0x678] sm:$0xff]
    %v261 = vld [vmem:[#allocation2 + $0x680] sm:$0xff]
    %v262 = vld [vmem:[#allocation2 + $0x688] sm:$0xff]
    %v263 = vld [vmem:[#allocation2 + $0x690] sm:$0xff]
    %v264 = vld [vmem:[#allocation2 + $0x698] sm:$0xff]
    %v265 = vld [vmem:[#allocation2 + $0x6a0] sm:$0xff]
    %v266 = vld [vmem:[#allocation2 + $0x6a8] sm:$0xff]
    %v267 = vld [vmem:[#allocation2 + $0x6b0] sm:$0xff]
    %v268 = vld [vmem:[#allocation2 + $0x6b8] sm:$0xff]
    %v269 = vld [vmem:[#allocation2 + $0x6c0] sm:$0xff]
    %v270 = vld [vmem:[#allocation2 + $0x6c8] sm:$0xff]
    %v271 = vld [vmem:[#allocation2 + $0x6d0] sm:$0xff]
    %v272 = vld [vmem:[#allocation2 + $0x6d8] sm:$0xff]
    %v273 = vld [vmem:[#allocation2 + $0x6e0] sm:$0xff]
    %v274 = vld [vmem:[#allocation2 + $0x6e8] sm:$0xff]
    %v275 = vld [vmem:[#allocation2 + $0x6f0] sm:$0xff]
    %v276 = vld [vmem:[#allocation2 + $0x6f8] sm:$0xff]
    %v277 = vld [vmem:[#allocation2 + $0x700] sm:$0xff]
    %v278 = vld [vmem:[#allocation2 + $0x708] sm:$0xff]
    %v279 = vld [vmem:[#allocation2 + $0x710] sm:$0xff]
    %v280 = vld [vmem:[#allocation2 + $0x718] sm:$0xff]
    %v281 = vld [vmem:[#allocation2 + $0x720] sm:$0xff]
    %v282 = vld [vmem:[#allocation2 + $0x728] sm:$0xff]
    %v283 = vld [vmem:[#allocation2 + $0x730] sm:$0xff]
    %v284 = vld [vmem:[#allocation2 + $0x738] sm:$0xff]
    %v285 = vld [vmem:[#allocation2 + $0x740] sm:$0xff]
    %v286 = vld [vmem:[#allocation2 + $0x748] sm:$0xff]
    %v287 = vld [vmem:[#allocation2 + $0x750] sm:$0xff]
    %v288 = vld [vmem:[#allocation2 + $0x758] sm:$0xff]
    %v289 = vld [vmem:[#allocation2 + $0x760] sm:$0xff]
    %v290 = vld [vmem:[#allocation2 + $0x768] sm:$0xff]
    %v291 = vld [vmem:[#allocation2 + $0x770] sm:$0xff]
    %v292 = vld [vmem:[#allocation2 + $0x778] sm:$0xff]
    %v293 = vld [vmem:[#allocation2 + $0x780] sm:$0xff]
    %v294 = vld [vmem:[#allocation2 + $0x788] sm:$0xff]
    %v295 = vld [vmem:[#allocation2 + $0x790] sm:$0xff]
    %v296 = vld [vmem:[#allocation2 + $0x798] sm:$0xff]
    %v297 = vld [vmem:[#allocation2 + $0x7a0] sm:$0xff]
    %v298 = vld [vmem:[#allocation2 + $0x7a8] sm:$0xff]
    %v299 = vld [vmem:[#allocation2 + $0x7b0] sm:$0xff]
    %v300 = vld [vmem:[#allocation2 + $0x7b8] sm:$0xff]
    %v301 = vld [vmem:[#allocation2 + $0x7c0] sm:$0xff]
    %v302 = vld [vmem:[#allocation2 + $0x7c8] sm:$0xff]
    %v303 = vld [vmem:[#allocation2 + $0x7d0] sm:$0xff]
    %v304 = vld [vmem:[#allocation2 + $0x7d8] sm:$0xff]
    %v305 = vld [vmem:[#allocation2 + $0x7e0] sm:$0xff]
    %v306 = vld [vmem:[#allocation2 + $0x7e8] sm:$0xff]
    %v307 = vld [vmem:[#allocation2 + $0x7f0] sm:$0xff]
    %v308 = vld [vmem:[#allocation2 + $0x7f8] sm:$0xff]
    %v309 = vld [vmem:[%s2] sm:$0xff]
    %v311 = vlaneseq
    %v312 = vshrl.u32 %v311, 7
    %v313 = vsub.s32 0, %v312
    %v314 = vrot.slane %v309, %v313
    %v315 = vlaneseq
    %v316 = vshrl.u32 %v315, 7
    %v317 = vsub.s32 1, %v316
    %v318 = vrot.slane %v309, %v317
    %v319 = vlaneseq
    %v320 = vshrl.u32 %v319, 7
    %v321 = vsub.s32 2, %v320
    %v322 = vrot.slane %v309, %v321
    %v323 = vlaneseq
    %v324 = vshrl.u32 %v323, 7
    %v325 = vsub.s32 3, %v324
    %v326 = vrot.slane %v309, %v325
    %v327 = vlaneseq
    %v328 = vshrl.u32 %v327, 7
    %v329 = vsub.s32 4, %v328
    %v330 = vrot.slane %v309, %v329
    %v331 = vlaneseq
    %v332 = vshrl.u32 %v331, 7
    %v333 = vsub.s32 5, %v332
    %v334 = vrot.slane %v309, %v333
    %v335 = vlaneseq
    %v336 = vshrl.u32 %v335, 7
    %v337 = vsub.s32 6, %v336
    %v338 = vrot.slane %v309, %v337
    %v339 = vlaneseq
    %v340 = vshrl.u32 %v339, 7
    %v341 = vsub.s32 7, %v340
    %v342 = vrot.slane %v309, %v341
    %v355 = vunpack.c.l.b16 %v49
    %v356 = vunpack.c.h.b16 %v49
    %v357 = vunpack.c.l.b16 %v50
    %v358 = vunpack.c.h.b16 %v50
    %v359 = vunpack.c.l.b16 %v51
    %v360 = vunpack.c.h.b16 %v51
    %v361 = vunpack.c.l.b16 %v52
    %v362 = vunpack.c.h.b16 %v52
    %v363 = vpack.c.b16 %v359, %v355
    %v364 = vpack.c.b16 %v360, %v356
    %v365 = vpack.c.b16 %v361, %v357
    %v366 = vpack.c.b16 %v362, %v358
    %v627 = vunpack.c.l.b16 %v53
    %v628 = vunpack.c.h.b16 %v53
    %v629 = vunpack.c.l.b16 %v54
    %v630 = vunpack.c.h.b16 %v54
    %v631 = vunpack.c.l.b16 %v55
    %v632 = vunpack.c.h.b16 %v55
    %v633 = vunpack.c.l.b16 %v56
    %v634 = vunpack.c.h.b16 %v56
    %v635 = vunpack.c.l.b16 %v57
    %v636 = vunpack.c.h.b16 %v57
    %v637 = vunpack.c.l.b16 %v58
    %v638 = vunpack.c.h.b16 %v58
    %v639 = vunpack.c.l.b16 %v59
    %v640 = vunpack.c.h.b16 %v59
    %v641 = vunpack.c.l.b16 %v60
    %v642 = vunpack.c.h.b16 %v60
    %v643 = vunpack.c.l.b16 %v61
    %v644 = vunpack.c.h.b16 %v61
    %v645 = vunpack.c.l.b16 %v62
    %v646 = vunpack.c.h.b16 %v62
    %v647 = vunpack.c.l.b16 %v63
    %v648 = vunpack.c.h.b16 %v63
    %v649 = vunpack.c.l.b16 %v64
    %v650 = vunpack.c.h.b16 %v64
    %v651 = vunpack.c.l.b16 %v65
    %v652 = vunpack.c.h.b16 %v65
    %v653 = vunpack.c.l.b16 %v66
    %v654 = vunpack.c.h.b16 %v66
    %v655 = vunpack.c.l.b16 %v67
    %v656 = vunpack.c.h.b16 %v67
    %v657 = vunpack.c.l.b16 %v68
    %v658 = vunpack.c.h.b16 %v68
    %v659 = vunpack.c.l.b16 %v69
    %v660 = vunpack.c.h.b16 %v69
    %v661 = vunpack.c.l.b16 %v70
    %v662 = vunpack.c.h.b16 %v70
    %v663 = vunpack.c.l.b16 %v71
    %v664 = vunpack.c.h.b16 %v71
    %v665 = vunpack.c.l.b16 %v72
    %v666 = vunpack.c.h.b16 %v72
    %v667 = vunpack.c.l.b16 %v73
    %v668 = vunpack.c.h.b16 %v73
    %v669 = vunpack.c.l.b16 %v74
    %v670 = vunpack.c.h.b16 %v74
    %v671 = vunpack.c.l.b16 %v75
    %v672 = vunpack.c.h.b16 %v75
    %v673 = vunpack.c.l.b16 %v76
    %v674 = vunpack.c.h.b16 %v76
    %v675 = vunpack.c.l.b16 %v77
    %v676 = vunpack.c.h.b16 %v77
    %v677 = vunpack.c.l.b16 %v78
    %v678 = vunpack.c.h.b16 %v78
    %v679 = vunpack.c.l.b16 %v79
    %v680 = vunpack.c.h.b16 %v79
    %v681 = vunpack.c.l.b16 %v80
    %v682 = vunpack.c.h.b16 %v80
    %v683 = vunpack.c.l.b16 %v81
    %v684 = vunpack.c.h.b16 %v81
    %v685 = vunpack.c.l.b16 %v82
    %v686 = vunpack.c.h.b16 %v82
    %v687 = vunpack.c.l.b16 %v83
    %v688 = vunpack.c.h.b16 %v83
    %v689 = vunpack.c.l.b16 %v84
    %v690 = vunpack.c.h.b16 %v84
    %v691 = vunpack.c.l.b16 %v85
    %v692 = vunpack.c.h.b16 %v85
    %v693 = vunpack.c.l.b16 %v86
    %v694 = vunpack.c.h.b16 %v86
    %v695 = vunpack.c.l.b16 %v87
    %v696 = vunpack.c.h.b16 %v87
    %v697 = vunpack.c.l.b16 %v88
    %v698 = vunpack.c.h.b16 %v88
    %v699 = vunpack.c.l.b16 %v89
    %v700 = vunpack.c.h.b16 %v89
    %v701 = vunpack.c.l.b16 %v90
    %v702 = vunpack.c.h.b16 %v90
    %v703 = vunpack.c.l.b16 %v91
    %v704 = vunpack.c.h.b16 %v91
    %v705 = vunpack.c.l.b16 %v92
    %v706 = vunpack.c.h.b16 %v92
    %v707 = vunpack.c.l.b16 %v93
    %v708 = vunpack.c.h.b16 %v93
    %v709 = vunpack.c.l.b16 %v94
    %v710 = vunpack.c.h.b16 %v94
    %v711 = vunpack.c.l.b16 %v95
    %v712 = vunpack.c.h.b16 %v95
    %v713 = vunpack.c.l.b16 %v96
    %v714 = vunpack.c.h.b16 %v96
    %v715 = vunpack.c.l.b16 %v97
    %v716 = vunpack.c.h.b16 %v97
    %v717 = vunpack.c.l.b16 %v98
    %v718 = vunpack.c.h.b16 %v98
    %v719 = vunpack.c.l.b16 %v99
    %v720 = vunpack.c.h.b16 %v99
    %v721 = vunpack.c.l.b16 %v100
    %v722 = vunpack.c.h.b16 %v100
    %v723 = vunpack.c.l.b16 %v101
    %v724 = vunpack.c.h.b16 %v101
    %v725 = vunpack.c.l.b16 %v102
    %v726 = vunpack.c.h.b16 %v102
    %v727 = vunpack.c.l.b16 %v103
    %v728 = vunpack.c.h.b16 %v103
    %v729 = vunpack.c.l.b16 %v104
    %v730 = vunpack.c.h.b16 %v104
    %v731 = vunpack.c.l.b16 %v105
    %v732 = vunpack.c.h.b16 %v105
    %v733 = vunpack.c.l.b16 %v106
    %v734 = vunpack.c.h.b16 %v106
    %v735 = vunpack.c.l.b16 %v107
    %v736 = vunpack.c.h.b16 %v107
    %v737 = vunpack.c.l.b16 %v108
    %v738 = vunpack.c.h.b16 %v108
    %v739 = vunpack.c.l.b16 %v109
    %v740 = vunpack.c.h.b16 %v109
    %v741 = vunpack.c.l.b16 %v110
    %v742 = vunpack.c.h.b16 %v110
    %v743 = vunpack.c.l.b16 %v111
    %v744 = vunpack.c.h.b16 %v111
    %v745 = vunpack.c.l.b16 %v112
    %v746 = vunpack.c.h.b16 %v112
    %v747 = vunpack.c.l.b16 %v113
    %v748 = vunpack.c.h.b16 %v113
    %v749 = vunpack.c.l.b16 %v114
    %v750 = vunpack.c.h.b16 %v114
    %v751 = vunpack.c.l.b16 %v115
    %v752 = vunpack.c.h.b16 %v115
    %v753 = vunpack.c.l.b16 %v116
    %v754 = vunpack.c.h.b16 %v116
    %v755 = vunpack.c.l.b16 %v117
    %v756 = vunpack.c.h.b16 %v117
    %v757 = vunpack.c.l.b16 %v118
    %v758 = vunpack.c.h.b16 %v118
    %v759 = vunpack.c.l.b16 %v119
    %v760 = vunpack.c.h.b16 %v119
    %v761 = vunpack.c.l.b16 %v120
    %v762 = vunpack.c.h.b16 %v120
    %v763 = vunpack.c.l.b16 %v121
    %v764 = vunpack.c.h.b16 %v121
    %v765 = vunpack.c.l.b16 %v122
    %v766 = vunpack.c.h.b16 %v122
    %v767 = vunpack.c.l.b16 %v123
    %v768 = vunpack.c.h.b16 %v123
    %v769 = vunpack.c.l.b16 %v124
    %v770 = vunpack.c.h.b16 %v124
    %v771 = vunpack.c.l.b16 %v125
    %v772 = vunpack.c.h.b16 %v125
    %v773 = vunpack.c.l.b16 %v126
    %v774 = vunpack.c.h.b16 %v126
    %v775 = vunpack.c.l.b16 %v127
    %v776 = vunpack.c.h.b16 %v127
    %v777 = vunpack.c.l.b16 %v128
    %v778 = vunpack.c.h.b16 %v128
    %v779 = vunpack.c.l.b16 %v129
    %v780 = vunpack.c.h.b16 %v129
    %v781 = vunpack.c.l.b16 %v130
    %v782 = vunpack.c.h.b16 %v130
    %v783 = vunpack.c.l.b16 %v131
    %v784 = vunpack.c.h.b16 %v131
    %v785 = vunpack.c.l.b16 %v132
    %v786 = vunpack.c.h.b16 %v132
    %v787 = vunpack.c.l.b16 %v133
    %v788 = vunpack.c.h.b16 %v133
    %v789 = vunpack.c.l.b16 %v134
    %v790 = vunpack.c.h.b16 %v134
    %v791 = vunpack.c.l.b16 %v135
    %v792 = vunpack.c.h.b16 %v135
    %v793 = vunpack.c.l.b16 %v136
    %v794 = vunpack.c.h.b16 %v136
    %v795 = vunpack.c.l.b16 %v137
    %v796 = vunpack.c.h.b16 %v137
    %v797 = vunpack.c.l.b16 %v138
    %v798 = vunpack.c.h.b16 %v138
    %v799 = vunpack.c.l.b16 %v139
    %v800 = vunpack.c.h.b16 %v139
    %v801 = vunpack.c.l.b16 %v140
    %v802 = vunpack.c.h.b16 %v140
    %v803 = vunpack.c.l.b16 %v141
    %v804 = vunpack.c.h.b16 %v141
    %v805 = vunpack.c.l.b16 %v142
    %v806 = vunpack.c.h.b16 %v142
    %v807 = vunpack.c.l.b16 %v143
    %v808 = vunpack.c.h.b16 %v143
    %v809 = vunpack.c.l.b16 %v144
    %v810 = vunpack.c.h.b16 %v144
    %v811 = vunpack.c.l.b16 %v145
    %v812 = vunpack.c.h.b16 %v145
    %v813 = vunpack.c.l.b16 %v146
    %v814 = vunpack.c.h.b16 %v146
    %v815 = vunpack.c.l.b16 %v147
    %v816 = vunpack.c.h.b16 %v147
    %v817 = vunpack.c.l.b16 %v148
    %v818 = vunpack.c.h.b16 %v148
    %v819 = vunpack.c.l.b16 %v149
    %v820 = vunpack.c.h.b16 %v149
    %v821 = vunpack.c.l.b16 %v150
    %v822 = vunpack.c.h.b16 %v150
    %v823 = vunpack.c.l.b16 %v151
    %v824 = vunpack.c.h.b16 %v151
    %v825 = vunpack.c.l.b16 %v152
    %v826 = vunpack.c.h.b16 %v152
    %v827 = vunpack.c.l.b16 %v153
    %v828 = vunpack.c.h.b16 %v153
    %v829 = vunpack.c.l.b16 %v154
    %v830 = vunpack.c.h.b16 %v154
    %v831 = vunpack.c.l.b16 %v155
    %v832 = vunpack.c.h.b16 %v155
    %v833 = vunpack.c.l.b16 %v156
    %v834 = vunpack.c.h.b16 %v156
    %v835 = vunpack.c.l.b16 %v157
    %v836 = vunpack.c.h.b16 %v157
    %v837 = vunpack.c.l.b16 %v158
    %v838 = vunpack.c.h.b16 %v158
    %v839 = vunpack.c.l.b16 %v159
    %v840 = vunpack.c.h.b16 %v159
    %v841 = vunpack.c.l.b16 %v160
    %v842 = vunpack.c.h.b16 %v160
    %v843 = vunpack.c.l.b16 %v161
    %v844 = vunpack.c.h.b16 %v161
    %v845 = vunpack.c.l.b16 %v162
    %v846 = vunpack.c.h.b16 %v162
    %v847 = vunpack.c.l.b16 %v163
    %v848 = vunpack.c.h.b16 %v163
    %v849 = vunpack.c.l.b16 %v164
    %v850 = vunpack.c.h.b16 %v164
    %v851 = vunpack.c.l.b16 %v165
    %v852 = vunpack.c.h.b16 %v165
    %v853 = vunpack.c.l.b16 %v166
    %v854 = vunpack.c.h.b16 %v166
    %v855 = vunpack.c.l.b16 %v167
    %v856 = vunpack.c.h.b16 %v167
    %v857 = vunpack.c.l.b16 %v168
    %v858 = vunpack.c.h.b16 %v168
    %v859 = vunpack.c.l.b16 %v169
    %v860 = vunpack.c.h.b16 %v169
    %v861 = vunpack.c.l.b16 %v170
    %v862 = vunpack.c.h.b16 %v170
    %v863 = vunpack.c.l.b16 %v171
    %v864 = vunpack.c.h.b16 %v171
    %v865 = vunpack.c.l.b16 %v172
    %v866 = vunpack.c.h.b16 %v172
    %v867 = vunpack.c.l.b16 %v173
    %v868 = vunpack.c.h.b16 %v173
    %v869 = vunpack.c.l.b16 %v174
    %v870 = vunpack.c.h.b16 %v174
    %v871 = vunpack.c.l.b16 %v175
    %v872 = vunpack.c.h.b16 %v175
    %v873 = vunpack.c.l.b16 %v176
    %v874 = vunpack.c.h.b16 %v176
    %v875 = vunpack.c.l.b16 %v177
    %v876 = vunpack.c.h.b16 %v177
    %v877 = vunpack.c.l.b16 %v178
    %v878 = vunpack.c.h.b16 %v178
    %v879 = vunpack.c.l.b16 %v179
    %v880 = vunpack.c.h.b16 %v179
    %v881 = vunpack.c.l.b16 %v180
    %v882 = vunpack.c.h.b16 %v180
    %v883 = vunpack.c.l.b16 %v181
    %v884 = vunpack.c.h.b16 %v181
    %v885 = vunpack.c.l.b16 %v182
    %v886 = vunpack.c.h.b16 %v182
    %v887 = vunpack.c.l.b16 %v183
    %v888 = vunpack.c.h.b16 %v183
    %v889 = vunpack.c.l.b16 %v184
    %v890 = vunpack.c.h.b16 %v184
    %v891 = vunpack.c.l.b16 %v185
    %v892 = vunpack.c.h.b16 %v185
    %v893 = vunpack.c.l.b16 %v186
    %v894 = vunpack.c.h.b16 %v186
    %v895 = vunpack.c.l.b16 %v187
    %v896 = vunpack.c.h.b16 %v187
    %v897 = vunpack.c.l.b16 %v188
    %v898 = vunpack.c.h.b16 %v188
    %v899 = vunpack.c.l.b16 %v189
    %v900 = vunpack.c.h.b16 %v189
    %v901 = vunpack.c.l.b16 %v190
    %v902 = vunpack.c.h.b16 %v190
    %v903 = vunpack.c.l.b16 %v191
    %v904 = vunpack.c.h.b16 %v191
    %v905 = vunpack.c.l.b16 %v192
    %v906 = vunpack.c.h.b16 %v192
    %v907 = vunpack.c.l.b16 %v193
    %v908 = vunpack.c.h.b16 %v193
    %v909 = vunpack.c.l.b16 %v194
    %v910 = vunpack.c.h.b16 %v194
    %v911 = vunpack.c.l.b16 %v195
    %v912 = vunpack.c.h.b16 %v195
    %v913 = vunpack.c.l.b16 %v196
    %v914 = vunpack.c.h.b16 %v196
    %v915 = vunpack.c.l.b16 %v197
    %v916 = vunpack.c.h.b16 %v197
    %v917 = vunpack.c.l.b16 %v198
    %v918 = vunpack.c.h.b16 %v198
    %v919 = vunpack.c.l.b16 %v199
    %v920 = vunpack.c.h.b16 %v199
    %v921 = vunpack.c.l.b16 %v200
    %v922 = vunpack.c.h.b16 %v200
    %v923 = vunpack.c.l.b16 %v201
    %v924 = vunpack.c.h.b16 %v201
    %v925 = vunpack.c.l.b16 %v202
    %v926 = vunpack.c.h.b16 %v202
    %v927 = vunpack.c.l.b16 %v203
    %v928 = vunpack.c.h.b16 %v203
    %v929 = vunpack.c.l.b16 %v204
    %v930 = vunpack.c.h.b16 %v204
    %v931 = vunpack.c.l.b16 %v205
    %v932 = vunpack.c.h.b16 %v205
    %v933 = vunpack.c.l.b16 %v206
    %v934 = vunpack.c.h.b16 %v206
    %v935 = vunpack.c.l.b16 %v207
    %v936 = vunpack.c.h.b16 %v207
    %v937 = vunpack.c.l.b16 %v208
    %v938 = vunpack.c.h.b16 %v208
    %v939 = vunpack.c.l.b16 %v209
    %v940 = vunpack.c.h.b16 %v209
    %v941 = vunpack.c.l.b16 %v210
    %v942 = vunpack.c.h.b16 %v210
    %v943 = vunpack.c.l.b16 %v211
    %v944 = vunpack.c.h.b16 %v211
    %v945 = vunpack.c.l.b16 %v212
    %v946 = vunpack.c.h.b16 %v212
    %v947 = vunpack.c.l.b16 %v213
    %v948 = vunpack.c.h.b16 %v213
    %v949 = vunpack.c.l.b16 %v214
    %v950 = vunpack.c.h.b16 %v214
    %v951 = vunpack.c.l.b16 %v215
    %v952 = vunpack.c.h.b16 %v215
    %v953 = vunpack.c.l.b16 %v216
    %v954 = vunpack.c.h.b16 %v216
    %v955 = vunpack.c.l.b16 %v217
    %v956 = vunpack.c.h.b16 %v217
    %v957 = vunpack.c.l.b16 %v218
    %v958 = vunpack.c.h.b16 %v218
    %v959 = vunpack.c.l.b16 %v219
    %v960 = vunpack.c.h.b16 %v219
    %v961 = vunpack.c.l.b16 %v220
    %v962 = vunpack.c.h.b16 %v220
    %v963 = vunpack.c.l.b16 %v221
    %v964 = vunpack.c.h.b16 %v221
    %v965 = vunpack.c.l.b16 %v222
    %v966 = vunpack.c.h.b16 %v222
    %v967 = vunpack.c.l.b16 %v223
    %v968 = vunpack.c.h.b16 %v223
    %v969 = vunpack.c.l.b16 %v224
    %v970 = vunpack.c.h.b16 %v224
    %v971 = vunpack.c.l.b16 %v225
    %v972 = vunpack.c.h.b16 %v225
    %v973 = vunpack.c.l.b16 %v226
    %v974 = vunpack.c.h.b16 %v226
    %v975 = vunpack.c.l.b16 %v227
    %v976 = vunpack.c.h.b16 %v227
    %v977 = vunpack.c.l.b16 %v228
    %v978 = vunpack.c.h.b16 %v228
    %v979 = vunpack.c.l.b16 %v229
    %v980 = vunpack.c.h.b16 %v229
    %v981 = vunpack.c.l.b16 %v230
    %v982 = vunpack.c.h.b16 %v230
    %v983 = vunpack.c.l.b16 %v231
    %v984 = vunpack.c.h.b16 %v231
    %v985 = vunpack.c.l.b16 %v232
    %v986 = vunpack.c.h.b16 %v232
    %v987 = vunpack.c.l.b16 %v233
    %v988 = vunpack.c.h.b16 %v233
    %v989 = vunpack.c.l.b16 %v234
    %v990 = vunpack.c.h.b16 %v234
    %v991 = vunpack.c.l.b16 %v235
    %v992 = vunpack.c.h.b16 %v235
    %v993 = vunpack.c.l.b16 %v236
    %v994 = vunpack.c.h.b16 %v236
    %v995 = vunpack.c.l.b16 %v237
    %v996 = vunpack.c.h.b16 %v237
    %v997 = vunpack.c.l.b16 %v238
    %v998 = vunpack.c.h.b16 %v238
    %v999 = vunpack.c.l.b16 %v239
    %v1000 = vunpack.c.h.b16 %v239
    %v1001 = vunpack.c.l.b16 %v240
    %v1002 = vunpack.c.h.b16 %v240
    %v1003 = vunpack.c.l.b16 %v241
    %v1004 = vunpack.c.h.b16 %v241
    %v1005 = vunpack.c.l.b16 %v242
    %v1006 = vunpack.c.h.b16 %v242
    %v1007 = vunpack.c.l.b16 %v243
    %v1008 = vunpack.c.h.b16 %v243
    %v1009 = vunpack.c.l.b16 %v244
    %v1010 = vunpack.c.h.b16 %v244
    %v1011 = vunpack.c.l.b16 %v245
    %v1012 = vunpack.c.h.b16 %v245
    %v1013 = vunpack.c.l.b16 %v246
    %v1014 = vunpack.c.h.b16 %v246
    %v1015 = vunpack.c.l.b16 %v247
    %v1016 = vunpack.c.h.b16 %v247
    %v1017 = vunpack.c.l.b16 %v248
    %v1018 = vunpack.c.h.b16 %v248
    %v1019 = vunpack.c.l.b16 %v249
    %v1020 = vunpack.c.h.b16 %v249
    %v1021 = vunpack.c.l.b16 %v250
    %v1022 = vunpack.c.h.b16 %v250
    %v1023 = vunpack.c.l.b16 %v251
    %v1024 = vunpack.c.h.b16 %v251
    %v1025 = vunpack.c.l.b16 %v252
    %v1026 = vunpack.c.h.b16 %v252
    %v1027 = vunpack.c.l.b16 %v253
    %v1028 = vunpack.c.h.b16 %v253
    %v1029 = vunpack.c.l.b16 %v254
    %v1030 = vunpack.c.h.b16 %v254
    %v1031 = vunpack.c.l.b16 %v255
    %v1032 = vunpack.c.h.b16 %v255
    %v1033 = vunpack.c.l.b16 %v256
    %v1034 = vunpack.c.h.b16 %v256
    %v1035 = vunpack.c.l.b16 %v257
    %v1036 = vunpack.c.h.b16 %v257
    %v1037 = vunpack.c.l.b16 %v258
    %v1038 = vunpack.c.h.b16 %v258
    %v1039 = vunpack.c.l.b16 %v259
    %v1040 = vunpack.c.h.b16 %v259
    %v1041 = vunpack.c.l.b16 %v260
    %v1042 = vunpack.c.h.b16 %v260
    %v1043 = vunpack.c.l.b16 %v261
    %v1044 = vunpack.c.h.b16 %v261
    %v1045 = vunpack.c.l.b16 %v262
    %v1046 = vunpack.c.h.b16 %v262
    %v1047 = vunpack.c.l.b16 %v263
    %v1048 = vunpack.c.h.b16 %v263
    %v1049 = vunpack.c.l.b16 %v264
    %v1050 = vunpack.c.h.b16 %v264
    %v1051 = vunpack.c.l.b16 %v265
    %v1052 = vunpack.c.h.b16 %v265
    %v1053 = vunpack.c.l.b16 %v266
    %v1054 = vunpack.c.h.b16 %v266
    %v1055 = vunpack.c.l.b16 %v267
    %v1056 = vunpack.c.h.b16 %v267
    %v1057 = vunpack.c.l.b16 %v268
    %v1058 = vunpack.c.h.b16 %v268
    %v1059 = vunpack.c.l.b16 %v269
    %v1060 = vunpack.c.h.b16 %v269
    %v1061 = vunpack.c.l.b16 %v270
    %v1062 = vunpack.c.h.b16 %v270
    %v1063 = vunpack.c.l.b16 %v271
    %v1064 = vunpack.c.h.b16 %v271
    %v1065 = vunpack.c.l.b16 %v272
    %v1066 = vunpack.c.h.b16 %v272
    %v1067 = vunpack.c.l.b16 %v273
    %v1068 = vunpack.c.h.b16 %v273
    %v1069 = vunpack.c.l.b16 %v274
    %v1070 = vunpack.c.h.b16 %v274
    %v1071 = vunpack.c.l.b16 %v275
    %v1072 = vunpack.c.h.b16 %v275
    %v1073 = vunpack.c.l.b16 %v276
    %v1074 = vunpack.c.h.b16 %v276
    %v1075 = vunpack.c.l.b16 %v277
    %v1076 = vunpack.c.h.b16 %v277
    %v1077 = vunpack.c.l.b16 %v278
    %v1078 = vunpack.c.h.b16 %v278
    %v1079 = vunpack.c.l.b16 %v279
    %v1080 = vunpack.c.h.b16 %v279
    %v1081 = vunpack.c.l.b16 %v280
    %v1082 = vunpack.c.h.b16 %v280
    %v1083 = vunpack.c.l.b16 %v281
    %v1084 = vunpack.c.h.b16 %v281
    %v1085 = vunpack.c.l.b16 %v282
    %v1086 = vunpack.c.h.b16 %v282
    %v1087 = vunpack.c.l.b16 %v283
    %v1088 = vunpack.c.h.b16 %v283
    %v1089 = vunpack.c.l.b16 %v284
    %v1090 = vunpack.c.h.b16 %v284
    %v1091 = vunpack.c.l.b16 %v285
    %v1092 = vunpack.c.h.b16 %v285
    %v1093 = vunpack.c.l.b16 %v286
    %v1094 = vunpack.c.h.b16 %v286
    %v1095 = vunpack.c.l.b16 %v287
    %v1096 = vunpack.c.h.b16 %v287
    %v1097 = vunpack.c.l.b16 %v288
    %v1098 = vunpack.c.h.b16 %v288
    %v1099 = vunpack.c.l.b16 %v289
    %v1100 = vunpack.c.h.b16 %v289
    %v1101 = vunpack.c.l.b16 %v290
    %v1102 = vunpack.c.h.b16 %v290
    %v1103 = vunpack.c.l.b16 %v291
    %v1104 = vunpack.c.h.b16 %v291
    %v1105 = vunpack.c.l.b16 %v292
    %v1106 = vunpack.c.h.b16 %v292
    %v1107 = vunpack.c.l.b16 %v293
    %v1108 = vunpack.c.h.b16 %v293
    %v1109 = vunpack.c.l.b16 %v294
    %v1110 = vunpack.c.h.b16 %v294
    %v1111 = vunpack.c.l.b16 %v295
    %v1112 = vunpack.c.h.b16 %v295
    %v1113 = vunpack.c.l.b16 %v296
    %v1114 = vunpack.c.h.b16 %v296
    %v1115 = vunpack.c.l.b16 %v297
    %v1116 = vunpack.c.h.b16 %v297
    %v1117 = vunpack.c.l.b16 %v298
    %v1118 = vunpack.c.h.b16 %v298
    %v1119 = vunpack.c.l.b16 %v299
    %v1120 = vunpack.c.h.b16 %v299
    %v1121 = vunpack.c.l.b16 %v300
    %v1122 = vunpack.c.h.b16 %v300
    %v1123 = vunpack.c.l.b16 %v301
    %v1124 = vunpack.c.h.b16 %v301
    %v1125 = vunpack.c.l.b16 %v302
    %v1126 = vunpack.c.h.b16 %v302
    %v1127 = vunpack.c.l.b16 %v303
    %v1128 = vunpack.c.h.b16 %v303
    %v1129 = vunpack.c.l.b16 %v304
    %v1130 = vunpack.c.h.b16 %v304
    %v1131 = vunpack.c.l.b16 %v305
    %v1132 = vunpack.c.h.b16 %v305
    %v1133 = vunpack.c.l.b16 %v306
    %v1134 = vunpack.c.h.b16 %v306
    %v1135 = vunpack.c.l.b16 %v307
    %v1136 = vunpack.c.h.b16 %v307
    %v1137 = vunpack.c.l.b16 %v308
    %v1138 = vunpack.c.h.b16 %v308
    %v1139 = vpack.c.b16 %v635, %v627
    %v1140 = vpack.c.b16 %v636, %v628
    %v1141 = vpack.c.b16 %v637, %v629
    %v1142 = vpack.c.b16 %v638, %v630
    %v1143 = vpack.c.b16 %v639, %v631
    %v1144 = vpack.c.b16 %v640, %v632
    %v1145 = vpack.c.b16 %v641, %v633
    %v1146 = vpack.c.b16 %v642, %v634
    %v1147 = vpack.c.b16 %v651, %v643
    %v1148 = vpack.c.b16 %v652, %v644
    %v1149 = vpack.c.b16 %v653, %v645
    %v1150 = vpack.c.b16 %v654, %v646
    %v1151 = vpack.c.b16 %v655, %v647
    %v1152 = vpack.c.b16 %v656, %v648
    %v1153 = vpack.c.b16 %v657, %v649
    %v1154 = vpack.c.b16 %v658, %v650
    %v1155 = vpack.c.b16 %v667, %v659
    %v1156 = vpack.c.b16 %v668, %v660
    %v1157 = vpack.c.b16 %v669, %v661
    %v1158 = vpack.c.b16 %v670, %v662
    %v1159 = vpack.c.b16 %v671, %v663
    %v1160 = vpack.c.b16 %v672, %v664
    %v1161 = vpack.c.b16 %v673, %v665
    %v1162 = vpack.c.b16 %v674, %v666
    %v1163 = vpack.c.b16 %v683, %v675
    %v1164 = vpack.c.b16 %v684, %v676
    %v1165 = vpack.c.b16 %v685, %v677
    %v1166 = vpack.c.b16 %v686, %v678
    %v1167 = vpack.c.b16 %v687, %v679
    %v1168 = vpack.c.b16 %v688, %v680
    %v1169 = vpack.c.b16 %v689, %v681
    %v1170 = vpack.c.b16 %v690, %v682
    %v1171 = vpack.c.b16 %v699, %v691
    %v1172 = vpack.c.b16 %v700, %v692
    %v1173 = vpack.c.b16 %v701, %v693
    %v1174 = vpack.c.b16 %v702, %v694
    %v1175 = vpack.c.b16 %v703, %v695
    %v1176 = vpack.c.b16 %v704, %v696
    %v1177 = vpack.c.b16 %v705, %v697
    %v1178 = vpack.c.b16 %v706, %v698
    %v1179 = vpack.c.b16 %v715, %v707
    %v1180 = vpack.c.b16 %v716, %v708
    %v1181 = vpack.c.b16 %v717, %v709
    %v1182 = vpack.c.b16 %v718, %v710
    %v1183 = vpack.c.b16 %v719, %v711
    %v1184 = vpack.c.b16 %v720, %v712
    %v1185 = vpack.c.b16 %v721, %v713
    %v1186 = vpack.c.b16 %v722, %v714
    %v1187 = vpack.c.b16 %v731, %v723
    %v1188 = vpack.c.b16 %v732, %v724
    %v1189 = vpack.c.b16 %v733, %v725
    %v1190 = vpack.c.b16 %v734, %v726
    %v1191 = vpack.c.b16 %v735, %v727
    %v1192 = vpack.c.b16 %v736, %v728
    %v1193 = vpack.c.b16 %v737, %v729
    %v1194 = vpack.c.b16 %v738, %v730
    %v1195 = vpack.c.b16 %v747, %v739
    %v1196 = vpack.c.b16 %v748, %v740
    %v1197 = vpack.c.b16 %v749, %v741
    %v1198 = vpack.c.b16 %v750, %v742
    %v1199 = vpack.c.b16 %v751, %v743
    %v1200 = vpack.c.b16 %v752, %v744
    %v1201 = vpack.c.b16 %v753, %v745
    %v1202 = vpack.c.b16 %v754, %v746
    %v1203 = vpack.c.b16 %v763, %v755
    %v1204 = vpack.c.b16 %v764, %v756
    %v1205 = vpack.c.b16 %v765, %v757
    %v1206 = vpack.c.b16 %v766, %v758
    %v1207 = vpack.c.b16 %v767, %v759
    %v1208 = vpack.c.b16 %v768, %v760
    %v1209 = vpack.c.b16 %v769, %v761
    %v1210 = vpack.c.b16 %v770, %v762
    %v1211 = vpack.c.b16 %v779, %v771
    %v1212 = vpack.c.b16 %v780, %v772
    %v1213 = vpack.c.b16 %v781, %v773
    %v1214 = vpack.c.b16 %v782, %v774
    %v1215 = vpack.c.b16 %v783, %v775
    %v1216 = vpack.c.b16 %v784, %v776
    %v1217 = vpack.c.b16 %v785, %v777
    %v1218 = vpack.c.b16 %v786, %v778
    %v1219 = vpack.c.b16 %v795, %v787
    %v1220 = vpack.c.b16 %v796, %v788
    %v1221 = vpack.c.b16 %v797, %v789
    %v1222 = vpack.c.b16 %v798, %v790
    %v1223 = vpack.c.b16 %v799, %v791
    %v1224 = vpack.c.b16 %v800, %v792
    %v1225 = vpack.c.b16 %v801, %v793
    %v1226 = vpack.c.b16 %v802, %v794
    %v1227 = vpack.c.b16 %v811, %v803
    %v1228 = vpack.c.b16 %v812, %v804
    %v1229 = vpack.c.b16 %v813, %v805
    %v1230 = vpack.c.b16 %v814, %v806
    %v1231 = vpack.c.b16 %v815, %v807
    %v1232 = vpack.c.b16 %v816, %v808
    %v1233 = vpack.c.b16 %v817, %v809
    %v1234 = vpack.c.b16 %v818, %v810
    %v1235 = vpack.c.b16 %v827, %v819
    %v1236 = vpack.c.b16 %v828, %v820
    %v1237 = vpack.c.b16 %v829, %v821
    %v1238 = vpack.c.b16 %v830, %v822
    %v1239 = vpack.c.b16 %v831, %v823
    %v1240 = vpack.c.b16 %v832, %v824
    %v1241 = vpack.c.b16 %v833, %v825
    %v1242 = vpack.c.b16 %v834, %v826
    %v1243 = vpack.c.b16 %v843, %v835
    %v1244 = vpack.c.b16 %v844, %v836
    %v1245 = vpack.c.b16 %v845, %v837
    %v1246 = vpack.c.b16 %v846, %v838
    %v1247 = vpack.c.b16 %v847, %v839
    %v1248 = vpack.c.b16 %v848, %v840
    %v1249 = vpack.c.b16 %v849, %v841
    %v1250 = vpack.c.b16 %v850, %v842
    %v1251 = vpack.c.b16 %v859, %v851
    %v1252 = vpack.c.b16 %v860, %v852
    %v1253 = vpack.c.b16 %v861, %v853
    %v1254 = vpack.c.b16 %v862, %v854
    %v1255 = vpack.c.b16 %v863, %v855
    %v1256 = vpack.c.b16 %v864, %v856
    %v1257 = vpack.c.b16 %v865, %v857
    %v1258 = vpack.c.b16 %v866, %v858
    %v1259 = vpack.c.b16 %v875, %v867
    %v1260 = vpack.c.b16 %v876, %v868
    %v1261 = vpack.c.b16 %v877, %v869
    %v1262 = vpack.c.b16 %v878, %v870
    %v1263 = vpack.c.b16 %v879, %v871
    %v1264 = vpack.c.b16 %v880, %v872
    %v1265 = vpack.c.b16 %v881, %v873
    %v1266 = vpack.c.b16 %v882, %v874
    %v1267 = vpack.c.b16 %v891, %v883
    %v1268 = vpack.c.b16 %v892, %v884
    %v1269 = vpack.c.b16 %v893, %v885
    %v1270 = vpack.c.b16 %v894, %v886
    %v1271 = vpack.c.b16 %v895, %v887
    %v1272 = vpack.c.b16 %v896, %v888
    %v1273 = vpack.c.b16 %v897, %v889
    %v1274 = vpack.c.b16 %v898, %v890
    %v1275 = vpack.c.b16 %v907, %v899
    %v1276 = vpack.c.b16 %v908, %v900
    %v1277 = vpack.c.b16 %v909, %v901
    %v1278 = vpack.c.b16 %v910, %v902
    %v1279 = vpack.c.b16 %v911, %v903
    %v1280 = vpack.c.b16 %v912, %v904
    %v1281 = vpack.c.b16 %v913, %v905
    %v1282 = vpack.c.b16 %v914, %v906
    %v1283 = vpack.c.b16 %v923, %v915
    %v1284 = vpack.c.b16 %v924, %v916
    %v1285 = vpack.c.b16 %v925, %v917
    %v1286 = vpack.c.b16 %v926, %v918
    %v1287 = vpack.c.b16 %v927, %v919
    %v1288 = vpack.c.b16 %v928, %v920
    %v1289 = vpack.c.b16 %v929, %v921
    %v1290 = vpack.c.b16 %v930, %v922
    %v1291 = vpack.c.b16 %v939, %v931
    %v1292 = vpack.c.b16 %v940, %v932
    %v1293 = vpack.c.b16 %v941, %v933
    %v1294 = vpack.c.b16 %v942, %v934
    %v1295 = vpack.c.b16 %v943, %v935
    %v1296 = vpack.c.b16 %v944, %v936
    %v1297 = vpack.c.b16 %v945, %v937
    %v1298 = vpack.c.b16 %v946, %v938
    %v1299 = vpack.c.b16 %v955, %v947
    %v1300 = vpack.c.b16 %v956, %v948
    %v1301 = vpack.c.b16 %v957, %v949
    %v1302 = vpack.c.b16 %v958, %v950
    %v1303 = vpack.c.b16 %v959, %v951
    %v1304 = vpack.c.b16 %v960, %v952
    %v1305 = vpack.c.b16 %v961, %v953
    %v1306 = vpack.c.b16 %v962, %v954
    %v1307 = vpack.c.b16 %v971, %v963
    %v1308 = vpack.c.b16 %v972, %v964
    %v1309 = vpack.c.b16 %v973, %v965
    %v1310 = vpack.c.b16 %v974, %v966
    %v1311 = vpack.c.b16 %v975, %v967
    %v1312 = vpack.c.b16 %v976, %v968
    %v1313 = vpack.c.b16 %v977, %v969
    %v1314 = vpack.c.b16 %v978, %v970
    %v1315 = vpack.c.b16 %v987, %v979
    %v1316 = vpack.c.b16 %v988, %v980
    %v1317 = vpack.c.b16 %v989, %v981
    %v1318 = vpack.c.b16 %v990, %v982
    %v1319 = vpack.c.b16 %v991, %v983
    %v1320 = vpack.c.b16 %v992, %v984
    %v1321 = vpack.c.b16 %v993, %v985
    %v1322 = vpack.c.b16 %v994, %v986
    %v1323 = vpack.c.b16 %v1003, %v995
    %v1324 = vpack.c.b16 %v1004, %v996
    %v1325 = vpack.c.b16 %v1005, %v997
    %v1326 = vpack.c.b16 %v1006, %v998
    %v1327 = vpack.c.b16 %v1007, %v999
    %v1328 = vpack.c.b16 %v1008, %v1000
    %v1329 = vpack.c.b16 %v1009, %v1001
    %v1330 = vpack.c.b16 %v1010, %v1002
    %v1331 = vpack.c.b16 %v1019, %v1011
    %v1332 = vpack.c.b16 %v1020, %v1012
    %v1333 = vpack.c.b16 %v1021, %v1013
    %v1334 = vpack.c.b16 %v1022, %v1014
    %v1335 = vpack.c.b16 %v1023, %v1015
    %v1336 = vpack.c.b16 %v1024, %v1016
    %v1337 = vpack.c.b16 %v1025, %v1017
    %v1338 = vpack.c.b16 %v1026, %v1018
    %v1339 = vpack.c.b16 %v1035, %v1027
    %v1340 = vpack.c.b16 %v1036, %v1028
    %v1341 = vpack.c.b16 %v1037, %v1029
    %v1342 = vpack.c.b16 %v1038, %v1030
    %v1343 = vpack.c.b16 %v1039, %v1031
    %v1344 = vpack.c.b16 %v1040, %v1032
    %v1345 = vpack.c.b16 %v1041, %v1033
    %v1346 = vpack.c.b16 %v1042, %v1034
    %v1347 = vpack.c.b16 %v1051, %v1043
    %v1348 = vpack.c.b16 %v1052, %v1044
    %v1349 = vpack.c.b16 %v1053, %v1045
    %v1350 = vpack.c.b16 %v1054, %v1046
    %v1351 = vpack.c.b16 %v1055, %v1047
    %v1352 = vpack.c.b16 %v1056, %v1048
    %v1353 = vpack.c.b16 %v1057, %v1049
    %v1354 = vpack.c.b16 %v1058, %v1050
    %v1355 = vpack.c.b16 %v1067, %v1059
    %v1356 = vpack.c.b16 %v1068, %v1060
    %v1357 = vpack.c.b16 %v1069, %v1061
    %v1358 = vpack.c.b16 %v1070, %v1062
    %v1359 = vpack.c.b16 %v1071, %v1063
    %v1360 = vpack.c.b16 %v1072, %v1064
    %v1361 = vpack.c.b16 %v1073, %v1065
    %v1362 = vpack.c.b16 %v1074, %v1066
    %v1363 = vpack.c.b16 %v1083, %v1075
    %v1364 = vpack.c.b16 %v1084, %v1076
    %v1365 = vpack.c.b16 %v1085, %v1077
    %v1366 = vpack.c.b16 %v1086, %v1078
    %v1367 = vpack.c.b16 %v1087, %v1079
    %v1368 = vpack.c.b16 %v1088, %v1080
    %v1369 = vpack.c.b16 %v1089, %v1081
    %v1370 = vpack.c.b16 %v1090, %v1082
    %v1371 = vpack.c.b16 %v1099, %v1091
    %v1372 = vpack.c.b16 %v1100, %v1092
    %v1373 = vpack.c.b16 %v1101, %v1093
    %v1374 = vpack.c.b16 %v1102, %v1094
    %v1375 = vpack.c.b16 %v1103, %v1095
    %v1376 = vpack.c.b16 %v1104, %v1096
    %v1377 = vpack.c.b16 %v1105, %v1097
    %v1378 = vpack.c.b16 %v1106, %v1098
    %v1379 = vpack.c.b16 %v1115, %v1107
    %v1380 = vpack.c.b16 %v1116, %v1108
    %v1381 = vpack.c.b16 %v1117, %v1109
    %v1382 = vpack.c.b16 %v1118, %v1110
    %v1383 = vpack.c.b16 %v1119, %v1111
    %v1384 = vpack.c.b16 %v1120, %v1112
    %v1385 = vpack.c.b16 %v1121, %v1113
    %v1386 = vpack.c.b16 %v1122, %v1114
    %v1387 = vpack.c.b16 %v1131, %v1123
    %v1388 = vpack.c.b16 %v1132, %v1124
    %v1389 = vpack.c.b16 %v1133, %v1125
    %v1390 = vpack.c.b16 %v1134, %v1126
    %v1391 = vpack.c.b16 %v1135, %v1127
    %v1392 = vpack.c.b16 %v1136, %v1128
    %v1393 = vpack.c.b16 %v1137, %v1129
    %v1394 = vpack.c.b16 %v1138, %v1130
    %1651 = vmatprep.subr.bf16.mxu0 %v1140
    %1652 = vmatpush1.bf16.msra.mxu0 %v1139
    %1653 = vmatprep.subr.bf16.mxu0 %v1148
    %1654 = vmatpush1.bf16.msra.mxu0 %v1147
    %1655 = vmatprep.subr.bf16.mxu0 %v1156
    %1656 = vmatpush1.bf16.msra.mxu0 %v1155
    %1657 = vmatprep.subr.bf16.mxu0 %v1164
    %1658 = vmatpush1.bf16.msra.mxu0 %v1163
    %1659 = vmatprep.subr.bf16.mxu0 %v1172
    %1660 = vmatpush1.bf16.msra.mxu0 %v1171
    %1661 = vmatprep.subr.bf16.mxu0 %v1180
    %1662 = vmatpush1.bf16.msra.mxu0 %v1179
    %1663 = vmatprep.subr.bf16.mxu0 %v1188
    %1664 = vmatpush1.bf16.msra.mxu0 %v1187
    %1665 = vmatprep.subr.bf16.mxu0 %v1196
    %1666 = vmatpush1.bf16.msra.mxu0 %v1195
    %1667 = vmatprep.subr.bf16.mxu0 %v1204
    %1668 = vmatpush1.bf16.msra.mxu0 %v1203
    %1669 = vmatprep.subr.bf16.mxu0 %v1212
    %1670 = vmatpush1.bf16.msra.mxu0 %v1211
    %1671 = vmatprep.subr.bf16.mxu0 %v1220
    %1672 = vmatpush1.bf16.msra.mxu0 %v1219
    %1673 = vmatprep.subr.bf16.mxu0 %v1228
    %1674 = vmatpush1.bf16.msra.mxu0 %v1227
    %1675 = vmatprep.subr.bf16.mxu0 %v1236
    %1676 = vmatpush1.bf16.msra.mxu0 %v1235
    %1677 = vmatprep.subr.bf16.mxu0 %v1244
    %1678 = vmatpush1.bf16.msra.mxu0 %v1243
    %1679 = vmatprep.subr.bf16.mxu0 %v1252
    %1680 = vmatpush1.bf16.msra.mxu0 %v1251
    %1681 = vmatprep.subr.bf16.mxu0 %v1260
    %1682 = vmatpush1.bf16.msra.mxu0 %v1259
    %1683 = vmatprep.mubr.bf16.mxu0 %v364
    %1684 = vmatmul.mubr.bf16.gmra.mrb[0].mxu0 %v363
    %v1685 = vpop.f32.mrb[0].mxu0
    %v1686 = vadd.f32 %v314, %v1685
    %v1687 = vpop.f32.mrb[0].mxu0
    %v1688 = vadd.f32 %v318, %v1687
    %v1689 = vpop.f32.mrb[0].mxu0
    %v1690 = vadd.f32 %v314, %v1689
    %v1691 = vpop.f32.mrb[0].mxu0
    %v1692 = vadd.f32 %v318, %v1691
    %1693 = vdwg.mxu0
    %1694 = vmatprep.subr.bf16.mxu0 %v1268
    %1695 = vmatpush1.bf16.msra.mxu0 %v1267
    %1696 = vmatprep.subr.bf16.mxu0 %v1276
    %1697 = vmatpush1.bf16.msra.mxu0 %v1275
    %1698 = vmatprep.subr.bf16.mxu0 %v1284
    %1699 = vmatpush1.bf16.msra.mxu0 %v1283
    %1700 = vmatprep.subr.bf16.mxu0 %v1292
    %1701 = vmatpush1.bf16.msra.mxu0 %v1291
    %1702 = vmatprep.subr.bf16.mxu0 %v1300
    %1703 = vmatpush1.bf16.msra.mxu0 %v1299
    %1704 = vmatprep.subr.bf16.mxu0 %v1308
    %1705 = vmatpush1.bf16.msra.mxu0 %v1307
    %1706 = vmatprep.subr.bf16.mxu0 %v1316
    %1707 = vmatpush1.bf16.msra.mxu0 %v1315
    %1708 = vmatprep.subr.bf16.mxu0 %v1324
    %1709 = vmatpush1.bf16.msra.mxu0 %v1323
    %1710 = vmatprep.subr.bf16.mxu0 %v1332
    %1711 = vmatpush1.bf16.msra.mxu0 %v1331
    %1712 = vmatprep.subr.bf16.mxu0 %v1340
    %1713 = vmatpush1.bf16.msra.mxu0 %v1339
    %1714 = vmatprep.subr.bf16.mxu0 %v1348
    %1715 = vmatpush1.bf16.msra.mxu0 %v1347
    %1716 = vmatprep.subr.bf16.mxu0 %v1356
    %1717 = vmatpush1.bf16.msra.mxu0 %v1355
    %1718 = vmatprep.subr.bf16.mxu0 %v1364
    %1719 = vmatpush1.bf16.msra.mxu0 %v1363
    %1720 = vmatprep.subr.bf16.mxu0 %v1372
    %1721 = vmatpush1.bf16.msra.mxu0 %v1371
    %1722 = vmatprep.subr.bf16.mxu0 %v1380
    %1723 = vmatpush1.bf16.msra.mxu0 %v1379
    %1724 = vmatprep.subr.bf16.mxu0 %v1388
    %1725 = vmatpush1.bf16.msra.mxu0 %v1387
    %1726 = vmatprep.mubr.bf16.mxu0 %v366
    %1727 = vmatmul.mubr.bf16.gmra.mrb[0].mxu0 %v365
    %v1728 = vpop.f32.mrb[0].mxu0
    %v1729 = vadd.f32 %v1686, %v1728
    %v1730 = vpop.f32.mrb[0].mxu0
    %v1731 = vadd.f32 %v1688, %v1730
    %v1732 = vpop.f32.mrb[0].mxu0
    %v1733 = vadd.f32 %v1690, %v1732
    %v1734 = vpop.f32.mrb[0].mxu0
    %v1735 = vadd.f32 %v1692, %v1734
    %1736 = vdwg.mxu0
    %1737 = vmatprep.subr.bf16.mxu0 %v1142
    %1738 = vmatpush1.bf16.msra.mxu0 %v1141
    %1739 = vmatprep.subr.bf16.mxu0 %v1150
    %1740 = vmatpush1.bf16.msra.mxu0 %v1149
    %1741 = vmatprep.subr.bf16.mxu0 %v1158
    %1742 = vmatpush1.bf16.msra.mxu0 %v1157
    %1743 = vmatprep.subr.bf16.mxu0 %v1166
    %1744 = vmatpush1.bf16.msra.mxu0 %v1165
    %1745 = vmatprep.subr.bf16.mxu0 %v1174
    %1746 = vmatpush1.bf16.msra.mxu0 %v1173
    %1747 = vmatprep.subr.bf16.mxu0 %v1182
    %1748 = vmatpush1.bf16.msra.mxu0 %v1181
    %1749 = vmatprep.subr.bf16.mxu0 %v1190
    %1750 = vmatpush1.bf16.msra.mxu0 %v1189
    %1751 = vmatprep.subr.bf16.mxu0 %v1198
    %1752 = vmatpush1.bf16.msra.mxu0 %v1197
    %1753 = vmatprep.subr.bf16.mxu0 %v1206
    %1754 = vmatpush1.bf16.msra.mxu0 %v1205
    %1755 = vmatprep.subr.bf16.mxu0 %v1214
    %1756 = vmatpush1.bf16.msra.mxu0 %v1213
    %1757 = vmatprep.subr.bf16.mxu0 %v1222
    %1758 = vmatpush1.bf16.msra.mxu0 %v1221
    %1759 = vmatprep.subr.bf16.mxu0 %v1230
    %1760 = vmatpush1.bf16.msra.mxu0 %v1229
    %1761 = vmatprep.subr.bf16.mxu0 %v1238
    %1762 = vmatpush1.bf16.msra.mxu0 %v1237
    %1763 = vmatprep.subr.bf16.mxu0 %v1246
    %1764 = vmatpush1.bf16.msra.mxu0 %v1245
    %1765 = vmatprep.subr.bf16.mxu0 %v1254
    %1766 = vmatpush1.bf16.msra.mxu0 %v1253
    %1767 = vmatprep.subr.bf16.mxu0 %v1262
    %1768 = vmatpush1.bf16.msra.mxu0 %v1261
    %1769 = vmatprep.mubr.bf16.mxu0 %v364
    %1770 = vmatmul.mubr.bf16.gmra.mrb[0].mxu0 %v363
    %v1771 = vpop.f32.mrb[0].mxu0
    %v1772 = vadd.f32 %v322, %v1771
    %v1773 = vpop.f32.mrb[0].mxu0
    %v1774 = vadd.f32 %v326, %v1773
    %v1775 = vpop.f32.mrb[0].mxu0
    %v1776 = vadd.f32 %v322, %v1775
    %v1777 = vpop.f32.mrb[0].mxu0
    %v1778 = vadd.f32 %v326, %v1777
    %1779 = vdwg.mxu0
    %1780 = vmatprep.subr.bf16.mxu0 %v1270
    %1781 = vmatpush1.bf16.msra.mxu0 %v1269
    %1782 = vmatprep.subr.bf16.mxu0 %v1278
    %1783 = vmatpush1.bf16.msra.mxu0 %v1277
    %1784 = vmatprep.subr.bf16.mxu0 %v1286
    %1785 = vmatpush1.bf16.msra.mxu0 %v1285
    %1786 = vmatprep.subr.bf16.mxu0 %v1294
    %1787 = vmatpush1.bf16.msra.mxu0 %v1293
    %1788 = vmatprep.subr.bf16.mxu0 %v1302
    %1789 = vmatpush1.bf16.msra.mxu0 %v1301
    %1790 = vmatprep.subr.bf16.mxu0 %v1310
    %1791 = vmatpush1.bf16.msra.mxu0 %v1309
    %1792 = vmatprep.subr.bf16.mxu0 %v1318
    %1793 = vmatpush1.bf16.msra.mxu0 %v1317
    %1794 = vmatprep.subr.bf16.mxu0 %v1326
    %1795 = vmatpush1.bf16.msra.mxu0 %v1325
    %1796 = vmatprep.subr.bf16.mxu0 %v1334
    %1797 = vmatpush1.bf16.msra.mxu0 %v1333
    %1798 = vmatprep.subr.bf16.mxu0 %v1342
    %1799 = vmatpush1.bf16.msra.mxu0 %v1341
    %1800 = vmatprep.subr.bf16.mxu0 %v1350
    %1801 = vmatpush1.bf16.msra.mxu0 %v1349
    %1802 = vmatprep.subr.bf16.mxu0 %v1358
    %1803 = vmatpush1.bf16.msra.mxu0 %v1357
    %1804 = vmatprep.subr.bf16.mxu0 %v1366
    %1805 = vmatpush1.bf16.msra.mxu0 %v1365
    %1806 = vmatprep.subr.bf16.mxu0 %v1374
    %1807 = vmatpush1.bf16.msra.mxu0 %v1373
    %1808 = vmatprep.subr.bf16.mxu0 %v1382
    %1809 = vmatpush1.bf16.msra.mxu0 %v1381
    %1810 = vmatprep.subr.bf16.mxu0 %v1390
    %1811 = vmatpush1.bf16.msra.mxu0 %v1389
    %1812 = vmatprep.mubr.bf16.mxu0 %v366
    %1813 = vmatmul.mubr.bf16.gmra.mrb[0].mxu0 %v365
    %v1814 = vpop.f32.mrb[0].mxu0
    %v1815 = vadd.f32 %v1772, %v1814
    %v1816 = vpop.f32.mrb[0].mxu0
    %v1817 = vadd.f32 %v1774, %v1816
    %v1818 = vpop.f32.mrb[0].mxu0
    %v1819 = vadd.f32 %v1776, %v1818
    %v1820 = vpop.f32.mrb[0].mxu0
    %v1821 = vadd.f32 %v1778, %v1820
    %1822 = vdwg.mxu0
    %1823 = vmatprep.subr.bf16.mxu0 %v1144
    %1824 = vmatpush1.bf16.msra.mxu0 %v1143
    %1825 = vmatprep.subr.bf16.mxu0 %v1152
    %1826 = vmatpush1.bf16.msra.mxu0 %v1151
    %1827 = vmatprep.subr.bf16.mxu0 %v1160
    %1828 = vmatpush1.bf16.msra.mxu0 %v1159
    %1829 = vmatprep.subr.bf16.mxu0 %v1168
    %1830 = vmatpush1.bf16.msra.mxu0 %v1167
    %1831 = vmatprep.subr.bf16.mxu0 %v1176
    %1832 = vmatpush1.bf16.msra.mxu0 %v1175
    %1833 = vmatprep.subr.bf16.mxu0 %v1184
    %1834 = vmatpush1.bf16.msra.mxu0 %v1183
    %1835 = vmatprep.subr.bf16.mxu0 %v1192
    %1836 = vmatpush1.bf16.msra.mxu0 %v1191
    %1837 = vmatprep.subr.bf16.mxu0 %v1200
    %1838 = vmatpush1.bf16.msra.mxu0 %v1199
    %1839 = vmatprep.subr.bf16.mxu0 %v1208
    %1840 = vmatpush1.bf16.msra.mxu0 %v1207
    %1841 = vmatprep.subr.bf16.mxu0 %v1216
    %1842 = vmatpush1.bf16.msra.mxu0 %v1215
    %1843 = vmatprep.subr.bf16.mxu0 %v1224
    %1844 = vmatpush1.bf16.msra.mxu0 %v1223
    %1845 = vmatprep.subr.bf16.mxu0 %v1232
    %1846 = vmatpush1.bf16.msra.mxu0 %v1231
    %1847 = vmatprep.subr.bf16.mxu0 %v1240
    %1848 = vmatpush1.bf16.msra.mxu0 %v1239
    %1849 = vmatprep.subr.bf16.mxu0 %v1248
    %1850 = vmatpush1.bf16.msra.mxu0 %v1247
    %1851 = vmatprep.subr.bf16.mxu0 %v1256
    %1852 = vmatpush1.bf16.msra.mxu0 %v1255
    %1853 = vmatprep.subr.bf16.mxu0 %v1264
    %1854 = vmatpush1.bf16.msra.mxu0 %v1263
    %1855 = vmatprep.mubr.bf16.mxu0 %v364
    %1856 = vmatmul.mubr.bf16.gmra.mrb[0].mxu0 %v363
    %v1857 = vpop.f32.mrb[0].mxu0
    %v1858 = vadd.f32 %v330, %v1857
    %v1859 = vpop.f32.mrb[0].mxu0
    %v1860 = vadd.f32 %v334, %v1859
    %v1861 = vpop.f32.mrb[0].mxu0
    %v1862 = vadd.f32 %v330, %v1861
    %v1863 = vpop.f32.mrb[0].mxu0
    %v1864 = vadd.f32 %v334, %v1863
    %1865 = vdwg.mxu0
    %1866 = vmatprep.subr.bf16.mxu0 %v1272
    %1867 = vmatpush1.bf16.msra.mxu0 %v1271
    %1868 = vmatprep.subr.bf16.mxu0 %v1280
    %1869 = vmatpush1.bf16.msra.mxu0 %v1279
    %1870 = vmatprep.subr.bf16.mxu0 %v1288
    %1871 = vmatpush1.bf16.msra.mxu0 %v1287
    %1872 = vmatprep.subr.bf16.mxu0 %v1296
    %1873 = vmatpush1.bf16.msra.mxu0 %v1295
    %1874 = vmatprep.subr.bf16.mxu0 %v1304
    %1875 = vmatpush1.bf16.msra.mxu0 %v1303
    %1876 = vmatprep.subr.bf16.mxu0 %v1312
    %1877 = vmatpush1.bf16.msra.mxu0 %v1311
    %1878 = vmatprep.subr.bf16.mxu0 %v1320
    %1879 = vmatpush1.bf16.msra.mxu0 %v1319
    %1880 = vmatprep.subr.bf16.mxu0 %v1328
    %1881 = vmatpush1.bf16.msra.mxu0 %v1327
    %1882 = vmatprep.subr.bf16.mxu0 %v1336
    %1883 = vmatpush1.bf16.msra.mxu0 %v1335
    %1884 = vmatprep.subr.bf16.mxu0 %v1344
    %1885 = vmatpush1.bf16.msra.mxu0 %v1343
    %1886 = vmatprep.subr.bf16.mxu0 %v1352
    %1887 = vmatpush1.bf16.msra.mxu0 %v1351
    %1888 = vmatprep.subr.bf16.mxu0 %v1360
    %1889 = vmatpush1.bf16.msra.mxu0 %v1359
    %1890 = vmatprep.subr.bf16.mxu0 %v1368
    %1891 = vmatpush1.bf16.msra.mxu0 %v1367
    %1892 = vmatprep.subr.bf16.mxu0 %v1376
    %1893 = vmatpush1.bf16.msra.mxu0 %v1375
    %1894 = vmatprep.subr.bf16.mxu0 %v1384
    %1895 = vmatpush1.bf16.msra.mxu0 %v1383
    %1896 = vmatprep.subr.bf16.mxu0 %v1392
    %1897 = vmatpush1.bf16.msra.mxu0 %v1391
    %1898 = vmatprep.mubr.bf16.mxu0 %v366
    %1899 = vmatmul.mubr.bf16.gmra.mrb[0].mxu0 %v365
    %v1900 = vpop.f32.mrb[0].mxu0
    %v1901 = vadd.f32 %v1858, %v1900
    %v1902 = vpop.f32.mrb[0].mxu0
    %v1903 = vadd.f32 %v1860, %v1902
    %v1904 = vpop.f32.mrb[0].mxu0
    %v1905 = vadd.f32 %v1862, %v1904
    %v1906 = vpop.f32.mrb[0].mxu0
    %v1907 = vadd.f32 %v1864, %v1906
    %1908 = vdwg.mxu0
    %1909 = vmatprep.subr.bf16.mxu0 %v1146
    %1910 = vmatpush1.bf16.msra.mxu0 %v1145
    %1911 = vmatprep.subr.bf16.mxu0 %v1154
    %1912 = vmatpush1.bf16.msra.mxu0 %v1153
    %1913 = vmatprep.subr.bf16.mxu0 %v1162
    %1914 = vmatpush1.bf16.msra.mxu0 %v1161
    %1915 = vmatprep.subr.bf16.mxu0 %v1170
    %1916 = vmatpush1.bf16.msra.mxu0 %v1169
    %1917 = vmatprep.subr.bf16.mxu0 %v1178
    %1918 = vmatpush1.bf16.msra.mxu0 %v1177
    %1919 = vmatprep.subr.bf16.mxu0 %v1186
    %1920 = vmatpush1.bf16.msra.mxu0 %v1185
    %1921 = vmatprep.subr.bf16.mxu0 %v1194
    %1922 = vmatpush1.bf16.msra.mxu0 %v1193
    %1923 = vmatprep.subr.bf16.mxu0 %v1202
    %1924 = vmatpush1.bf16.msra.mxu0 %v1201
    %1925 = vmatprep.subr.bf16.mxu0 %v1210
    %1926 = vmatpush1.bf16.msra.mxu0 %v1209
    %1927 = vmatprep.subr.bf16.mxu0 %v1218
    %1928 = vmatpush1.bf16.msra.mxu0 %v1217
    %1929 = vmatprep.subr.bf16.mxu0 %v1226
    %1930 = vmatpush1.bf16.msra.mxu0 %v1225
    %1931 = vmatprep.subr.bf16.mxu0 %v1234
    %1932 = vmatpush1.bf16.msra.mxu0 %v1233
    %1933 = vmatprep.subr.bf16.mxu0 %v1242
    %1934 = vmatpush1.bf16.msra.mxu0 %v1241
    %1935 = vmatprep.subr.bf16.mxu0 %v1250
    %1936 = vmatpush1.bf16.msra.mxu0 %v1249
    %1937 = vmatprep.subr.bf16.mxu0 %v1258
    %1938 = vmatpush1.bf16.msra.mxu0 %v1257
    %1939 = vmatprep.subr.bf16.mxu0 %v1266
    %1940 = vmatpush1.bf16.msra.mxu0 %v1265
    %1941 = vmatprep.mubr.bf16.mxu0 %v364
    %1942 = vmatmul.mubr.bf16.gmra.mrb[0].mxu0 %v363
    %v1943 = vpop.f32.mrb[0].mxu0
    %v1944 = vadd.f32 %v338, %v1943
    %v1945 = vpop.f32.mrb[0].mxu0
    %v1946 = vadd.f32 %v342, %v1945
    %v1947 = vpop.f32.mrb[0].mxu0
    %v1948 = vadd.f32 %v338, %v1947
    %v1949 = vpop.f32.mrb[0].mxu0
    %v1950 = vadd.f32 %v342, %v1949
    %1951 = vdwg.mxu0
    %1952 = vmatprep.subr.bf16.mxu0 %v1274
    %1953 = vmatpush1.bf16.msra.mxu0 %v1273
    %1954 = vmatprep.subr.bf16.mxu0 %v1282
    %1955 = vmatpush1.bf16.msra.mxu0 %v1281
    %1956 = vmatprep.subr.bf16.mxu0 %v1290
    %1957 = vmatpush1.bf16.msra.mxu0 %v1289
    %1958 = vmatprep.subr.bf16.mxu0 %v1298
    %1959 = vmatpush1.bf16.msra.mxu0 %v1297
    %1960 = vmatprep.subr.bf16.mxu0 %v1306
    %1961 = vmatpush1.bf16.msra.mxu0 %v1305
    %1962 = vmatprep.subr.bf16.mxu0 %v1314
    %1963 = vmatpush1.bf16.msra.mxu0 %v1313
    %1964 = vmatprep.subr.bf16.mxu0 %v1322
    %1965 = vmatpush1.bf16.msra.mxu0 %v1321
    %1966 = vmatprep.subr.bf16.mxu0 %v1330
    %1967 = vmatpush1.bf16.msra.mxu0 %v1329
    %1968 = vmatprep.subr.bf16.mxu0 %v1338
    %1969 = vmatpush1.bf16.msra.mxu0 %v1337
    %1970 = vmatprep.subr.bf16.mxu0 %v1346
    %1971 = vmatpush1.bf16.msra.mxu0 %v1345
    %1972 = vmatprep.subr.bf16.mxu0 %v1354
    %1973 = vmatpush1.bf16.msra.mxu0 %v1353
    %1974 = vmatprep.subr.bf16.mxu0 %v1362
    %1975 = vmatpush1.bf16.msra.mxu0 %v1361
    %1976 = vmatprep.subr.bf16.mxu0 %v1370
    %1977 = vmatpush1.bf16.msra.mxu0 %v1369
    %1978 = vmatprep.subr.bf16.mxu0 %v1378
    %1979 = vmatpush1.bf16.msra.mxu0 %v1377
    %1980 = vmatprep.subr.bf16.mxu0 %v1386
    %1981 = vmatpush1.bf16.msra.mxu0 %v1385
    %1982 = vmatprep.subr.bf16.mxu0 %v1394
    %1983 = vmatpush1.bf16.msra.mxu0 %v1393
    %1984 = vmatprep.mubr.bf16.mxu0 %v366
    %1985 = vmatmul.mubr.bf16.gmra.mrb[0].mxu0 %v365
    %v1986 = vpop.f32.mrb[0].mxu0
    %v1987 = vadd.f32 %v1944, %v1986
    %v1988 = vpop.f32.mrb[0].mxu0
    %v1989 = vadd.f32 %v1946, %v1988
    %v1990 = vpop.f32.mrb[0].mxu0
    %v1991 = vadd.f32 %v1948, %v1990
    %v1992 = vpop.f32.mrb[0].mxu0
    %v1993 = vadd.f32 %v1950, %v1992
    %1994 = vdwg.mxu0
    %v1995 = vadd.f32 %v1729, %v1731
    %v1996 = vadd.f32 %v1995, %v1815
    %v1997 = vadd.f32 %v1996, %v1817
    %v1998 = vadd.f32 %v1997, %v1901
    %v1999 = vadd.f32 %v1998, %v1903
    %v2000 = vadd.f32 %v1999, %v1987
    %v2001 = vadd.f32 %v2000, %v1989
    %2002 = vadd.xlane.f32.xlu0 %v2001
    %v2003 = vpop.xlane.xlu0 %2002
    %v2004 = vadd.f32 %v1733, %v1735
    %v2005 = vadd.f32 %v2004, %v1819
    %v2006 = vadd.f32 %v2005, %v1821
    %v2007 = vadd.f32 %v2006, %v1905
    %v2008 = vadd.f32 %v2007, %v1907
    %v2009 = vadd.f32 %v2008, %v1991
    %v2010 = vadd.f32 %v2009, %v1993
    %2011 = vadd.xlane.f32.xlu0 %v2010
    %v2012 = vpop.xlane.xlu0 %2011
    %v2013 = vmul.f32 %v2003, 0.0009765625
    %v2014 = vmul.f32 %v2012, 0.0009765625
    %v2015 = vsub.f32 %v1729, %v2013
    %v2016 = vsub.f32 %v1731, %v2013
    %v2017 = vsub.f32 %v1815, %v2013
    %v2018 = vsub.f32 %v1817, %v2013
    %v2019 = vsub.f32 %v1901, %v2013
    %v2020 = vsub.f32 %v1903, %v2013
    %v2021 = vsub.f32 %v1987, %v2013
    %v2022 = vsub.f32 %v1989, %v2013
    %v2023 = vsub.f32 %v1733, %v2014
    %v2024 = vsub.f32 %v1735, %v2014
    %v2025 = vsub.f32 %v1819, %v2014
    %v2026 = vsub.f32 %v1821, %v2014
    %v2027 = vsub.f32 %v1905, %v2014
    %v2028 = vsub.f32 %v1907, %v2014
    %v2029 = vsub.f32 %v1991, %v2014
    %v2030 = vsub.f32 %v1993, %v2014
    %v2031 = vmul.f32 %v2015, %v2015
    %v2032 = vmul.f32 %v2016, %v2016
    %v2033 = vmul.f32 %v2017, %v2017
    %v2034 = vmul.f32 %v2018, %v2018
    %v2035 = vmul.f32 %v2019, %v2019
    %v2036 = vmul.f32 %v2020, %v2020
    %v2037 = vmul.f32 %v2021, %v2021
    %v2038 = vmul.f32 %v2022, %v2022
    %v2039 = vmul.f32 %v2023, %v2023
    %v2040 = vmul.f32 %v2024, %v2024
    %v2041 = vmul.f32 %v2025, %v2025
    %v2042 = vmul.f32 %v2026, %v2026
    %v2043 = vmul.f32 %v2027, %v2027
    %v2044 = vmul.f32 %v2028, %v2028
    %v2045 = vmul.f32 %v2029, %v2029
    %v2046 = vmul.f32 %v2030, %v2030
    %v2047 = vadd.f32 %v2031, %v2032
    %v2048 = vadd.f32 %v2047, %v2033
    %v2049 = vadd.f32 %v2048, %v2034
    %v2050 = vadd.f32 %v2049, %v2035
    %v2051 = vadd.f32 %v2050, %v2036
    %v2052 = vadd.f32 %v2051, %v2037
    %v2053 = vadd.f32 %v2052, %v2038
    %2054 = vadd.xlane.f32.xlu0 %v2053
    %v2055 = vpop.xlane.xlu0 %2054
    %v2056 = vadd.f32 %v2039, %v2040
    %v2057 = vadd.f32 %v2056, %v2041
    %v2058 = vadd.f32 %v2057, %v2042
    %v2059 = vadd.f32 %v2058, %v2043
    %v2060 = vadd.f32 %v2059, %v2044
    %v2061 = vadd.f32 %v2060, %v2045
    %v2062 = vadd.f32 %v2061, %v2046
    %2063 = vadd.xlane.f32.xlu0 %v2062
    %v2064 = vpop.xlane.xlu0 %2063
    %v2065 = vmul.f32 %v2055, 0.0009765625
    %v2066 = vmul.f32 %v2064, 0.0009765625
    %v2067 = vadd.f32 %v2065, 1e-05
    %v2068 = vadd.f32 %v2066, 1e-05
    %v2069 = vrsqrt.pop %v2067
    %v2070 = vrsqrt.pop %v2068
    %v2071 = vmul.f32 %v2015, %v2069
    %v2072 = vmul.f32 %v2016, %v2069
    %v2073 = vmul.f32 %v2017, %v2069
    %v2074 = vmul.f32 %v2018, %v2069
    %v2075 = vmul.f32 %v2019, %v2069
    %v2076 = vmul.f32 %v2020, %v2069
    %v2077 = vmul.f32 %v2021, %v2069
    %v2078 = vmul.f32 %v2022, %v2069
    %v2079 = vmul.f32 %v2023, %v2070
    %v2080 = vmul.f32 %v2024, %v2070
    %v2081 = vmul.f32 %v2025, %v2070
    %v2082 = vmul.f32 %v2026, %v2070
    %v2083 = vmul.f32 %v2027, %v2070
    %v2084 = vmul.f32 %v2028, %v2070
    %v2085 = vmul.f32 %v2029, %v2070
    %v2086 = vmul.f32 %v2030, %v2070
    %vm2087 = vcmp.ge.f32.partialorder %v2071, 0.0
    %vm2088 = vcmp.ge.f32.partialorder %v2072, 0.0
    %vm2089 = vcmp.ge.f32.partialorder %v2073, 0.0
    %vm2090 = vcmp.ge.f32.partialorder %v2074, 0.0
    %vm2091 = vcmp.ge.f32.partialorder %v2075, 0.0
    %vm2092 = vcmp.ge.f32.partialorder %v2076, 0.0
    %vm2093 = vcmp.ge.f32.partialorder %v2077, 0.0
    %vm2094 = vcmp.ge.f32.partialorder %v2078, 0.0
    %vm2095 = vcmp.ge.f32.partialorder %v2079, 0.0
    %vm2096 = vcmp.ge.f32.partialorder %v2080, 0.0
    %vm2097 = vcmp.ge.f32.partialorder %v2081, 0.0
    %vm2098 = vcmp.ge.f32.partialorder %v2082, 0.0
    %vm2099 = vcmp.ge.f32.partialorder %v2083, 0.0
    %vm2100 = vcmp.ge.f32.partialorder %v2084, 0.0
    %vm2101 = vcmp.ge.f32.partialorder %v2085, 0.0
    %vm2102 = vcmp.ge.f32.partialorder %v2086, 0.0
    %v2103 = vmul.f32 %v2071, 0.01
    %v2104 = vmul.f32 %v2072, 0.01
    %v2105 = vmul.f32 %v2073, 0.01
    %v2106 = vmul.f32 %v2074, 0.01
    %v2107 = vmul.f32 %v2075, 0.01
    %v2108 = vmul.f32 %v2076, 0.01
    %v2109 = vmul.f32 %v2077, 0.01
    %v2110 = vmul.f32 %v2078, 0.01
    %v2111 = vmul.f32 %v2079, 0.01
    %v2112 = vmul.f32 %v2080, 0.01
    %v2113 = vmul.f32 %v2081, 0.01
    %v2114 = vmul.f32 %v2082, 0.01
    %v2115 = vmul.f32 %v2083, 0.01
    %v2116 = vmul.f32 %v2084, 0.01
    %v2117 = vmul.f32 %v2085, 0.01
    %v2118 = vmul.f32 %v2086, 0.01
    %v2119 = vsel %vm2087, %v2071, %v2103
    %v2120 = vsel %vm2088, %v2072, %v2104
    %v2121 = vsel %vm2089, %v2073, %v2105
    %v2122 = vsel %vm2090, %v2074, %v2106
    %v2123 = vsel %vm2091, %v2075, %v2107
    %v2124 = vsel %vm2092, %v2076, %v2108
    %v2125 = vsel %vm2093, %v2077, %v2109
    %v2126 = vsel %vm2094, %v2078, %v2110
    %v2127 = vsel %vm2095, %v2079, %v2111
    %v2128 = vsel %vm2096, %v2080, %v2112
    %v2129 = vsel %vm2097, %v2081, %v2113
    %v2130 = vsel %vm2098, %v2082, %v2114
    %v2131 = vsel %vm2099, %v2083, %v2115
    %v2132 = vsel %vm2100, %v2084, %v2116
    %v2133 = vsel %vm2101, %v2085, %v2117
    %v2134 = vsel %vm2102, %v2086, %v2118
    %v2135 = vpack.c.bf16 %v2127, %v2119
    %v2136 = vpack.c.bf16 %v2128, %v2120
    %v2137 = vpack.c.bf16 %v2129, %v2121
    %v2138 = vpack.c.bf16 %v2130, %v2122
    %v2139 = vpack.c.bf16 %v2131, %v2123
    %v2140 = vpack.c.bf16 %v2132, %v2124
    %v2141 = vpack.c.bf16 %v2133, %v2125
    %v2142 = vpack.c.bf16 %v2134, %v2126
    %v2143 = vld [vmem:[#allocation4] sm:$0xf]
    %v2144 = vld [vmem:[#allocation4 + $0x4] sm:$0xf]
    %v2145 = vld [vmem:[#allocation4 + $0x8] sm:$0xf]
    %v2146 = vld [vmem:[#allocation4 + $0xc] sm:$0xf]
    %v2147 = vld [vmem:[#allocation4 + $0x10] sm:$0xf]
    %v2148 = vld [vmem:[#allocation4 + $0x14] sm:$0xf]
    %v2149 = vld [vmem:[#allocation4 + $0x18] sm:$0xf]
    %v2150 = vld [vmem:[#allocation4 + $0x1c] sm:$0xf]
    %v2151 = vld [vmem:[#allocation4 + $0x20] sm:$0xf]
    %v2152 = vld [vmem:[#allocation4 + $0x24] sm:$0xf]
    %v2153 = vld [vmem:[#allocation4 + $0x28] sm:$0xf]
    %v2154 = vld [vmem:[#allocation4 + $0x2c] sm:$0xf]
    %v2155 = vld [vmem:[#allocation4 + $0x30] sm:$0xf]
    %v2156 = vld [vmem:[#allocation4 + $0x34] sm:$0xf]
    %v2157 = vld [vmem:[#allocation4 + $0x38] sm:$0xf]
    %v2158 = vld [vmem:[#allocation4 + $0x3c] sm:$0xf]
    %v2159 = vld [vmem:[#allocation4 + $0x40] sm:$0xf]
    %v2160 = vld [vmem:[#allocation4 + $0x44] sm:$0xf]
    %v2161 = vld [vmem:[#allocation4 + $0x48] sm:$0xf]
    %v2162 = vld [vmem:[#allocation4 + $0x4c] sm:$0xf]
    %v2163 = vld [vmem:[#allocation4 + $0x50] sm:$0xf]
    %v2164 = vld [vmem:[#allocation4 + $0x54] sm:$0xf]
    %v2165 = vld [vmem:[#allocation4 + $0x58] sm:$0xf]
    %v2166 = vld [vmem:[#allocation4 + $0x5c] sm:$0xf]
    %v2167 = vld [vmem:[#allocation4 + $0x60] sm:$0xf]
    %v2168 = vld [vmem:[#allocation4 + $0x64] sm:$0xf]
    %v2169 = vld [vmem:[#allocation4 + $0x68] sm:$0xf]
    %v2170 = vld [vmem:[#allocation4 + $0x6c] sm:$0xf]
    %v2171 = vld [vmem:[#allocation4 + $0x70] sm:$0xf]
    %v2172 = vld [vmem:[#allocation4 + $0x74] sm:$0xf]
    %v2173 = vld [vmem:[#allocation4 + $0x78] sm:$0xf]
    %v2174 = vld [vmem:[#allocation4 + $0x7c] sm:$0xf]
    %v2175 = vld [vmem:[#allocation4 + $0x80] sm:$0xf]
    %v2176 = vld [vmem:[#allocation4 + $0x84] sm:$0xf]
    %v2177 = vld [vmem:[#allocation4 + $0x88] sm:$0xf]
    %v2178 = vld [vmem:[#allocation4 + $0x8c] sm:$0xf]
    %v2179 = vld [vmem:[#allocation4 + $0x90] sm:$0xf]
    %v2180 = vld [vmem:[#allocation4 + $0x94] sm:$0xf]
    %v2181 = vld [vmem:[#allocation4 + $0x98] sm:$0xf]
    %v2182 = vld [vmem:[#allocation4 + $0x9c] sm:$0xf]
    %v2183 = vld [vmem:[#allocation4 + $0xa0] sm:$0xf]
    %v2184 = vld [vmem:[#allocation4 + $0xa4] sm:$0xf]
    %v2185 = vld [vmem:[#allocation4 + $0xa8] sm:$0xf]
    %v2186 = vld [vmem:[#allocation4 + $0xac] sm:$0xf]
    %v2187 = vld [vmem:[#allocation4 + $0xb0] sm:$0xf]
    %v2188 = vld [vmem:[#allocation4 + $0xb4] sm:$0xf]
    %v2189 = vld [vmem:[#allocation4 + $0xb8] sm:$0xf]
    %v2190 = vld [vmem:[#allocation4 + $0xbc] sm:$0xf]
    %v2191 = vld [vmem:[#allocation4 + $0xc0] sm:$0xf]
    %v2192 = vld [vmem:[#allocation4 + $0xc4] sm:$0xf]
    %v2193 = vld [vmem:[#allocation4 + $0xc8] sm:$0xf]
    %v2194 = vld [vmem:[#allocation4 + $0xcc] sm:$0xf]
    %v2195 = vld [vmem:[#allocation4 + $0xd0] sm:$0xf]
    %v2196 = vld [vmem:[#allocation4 + $0xd4] sm:$0xf]
    %v2197 = vld [vmem:[#allocation4 + $0xd8] sm:$0xf]
    %v2198 = vld [vmem:[#allocation4 + $0xdc] sm:$0xf]
    %v2199 = vld [vmem:[#allocation4 + $0xe0] sm:$0xf]
    %v2200 = vld [vmem:[#allocation4 + $0xe4] sm:$0xf]
    %v2201 = vld [vmem:[#allocation4 + $0xe8] sm:$0xf]
    %v2202 = vld [vmem:[#allocation4 + $0xec] sm:$0xf]
    %v2203 = vld [vmem:[#allocation4 + $0xf0] sm:$0xf]
    %v2204 = vld [vmem:[#allocation4 + $0xf4] sm:$0xf]
    %v2205 = vld [vmem:[#allocation4 + $0xf8] sm:$0xf]
    %v2206 = vld [vmem:[#allocation4 + $0xfc] sm:$0xf]
    %v2207 = vld [vmem:[#allocation4 + $0x100] sm:$0xf]
    %v2208 = vld [vmem:[#allocation4 + $0x104] sm:$0xf]
    %v2209 = vld [vmem:[#allocation4 + $0x108] sm:$0xf]
    %v2210 = vld [vmem:[#allocation4 + $0x10c] sm:$0xf]
    %v2211 = vld [vmem:[#allocation4 + $0x110] sm:$0xf]
    %v2212 = vld [vmem:[#allocation4 + $0x114] sm:$0xf]
    %v2213 = vld [vmem:[#allocation4 + $0x118] sm:$0xf]
    %v2214 = vld [vmem:[#allocation4 + $0x11c] sm:$0xf]
    %v2215 = vld [vmem:[#allocation4 + $0x120] sm:$0xf]
    %v2216 = vld [vmem:[#allocation4 + $0x124] sm:$0xf]
    %v2217 = vld [vmem:[#allocation4 + $0x128] sm:$0xf]
    %v2218 = vld [vmem:[#allocation4 + $0x12c] sm:$0xf]
    %v2219 = vld [vmem:[#allocation4 + $0x130] sm:$0xf]
    %v2220 = vld [vmem:[#allocation4 + $0x134] sm:$0xf]
    %v2221 = vld [vmem:[#allocation4 + $0x138] sm:$0xf]
    %v2222 = vld [vmem:[#allocation4 + $0x13c] sm:$0xf]
    %v2223 = vld [vmem:[#allocation4 + $0x140] sm:$0xf]
    %v2224 = vld [vmem:[#allocation4 + $0x144] sm:$0xf]
    %v2225 = vld [vmem:[#allocation4 + $0x148] sm:$0xf]
    %v2226 = vld [vmem:[#allocation4 + $0x14c] sm:$0xf]
    %v2227 = vld [vmem:[#allocation4 + $0x150] sm:$0xf]
    %v2228 = vld [vmem:[#allocation4 + $0x154] sm:$0xf]
    %v2229 = vld [vmem:[#allocation4 + $0x158] sm:$0xf]
    %v2230 = vld [vmem:[#allocation4 + $0x15c] sm:$0xf]
    %v2231 = vld [vmem:[#allocation4 + $0x160] sm:$0xf]
    %v2232 = vld [vmem:[#allocation4 + $0x164] sm:$0xf]
    %v2233 = vld [vmem:[#allocation4 + $0x168] sm:$0xf]
    %v2234 = vld [vmem:[#allocation4 + $0x16c] sm:$0xf]
    %v2235 = vld [vmem:[#allocation4 + $0x170] sm:$0xf]
    %v2236 = vld [vmem:[#allocation4 + $0x174] sm:$0xf]
    %v2237 = vld [vmem:[#allocation4 + $0x178] sm:$0xf]
    %v2238 = vld [vmem:[#allocation4 + $0x17c] sm:$0xf]
    %v2239 = vld [vmem:[#allocation4 + $0x180] sm:$0xf]
    %v2240 = vld [vmem:[#allocation4 + $0x184] sm:$0xf]
    %v2241 = vld [vmem:[#allocation4 + $0x188] sm:$0xf]
    %v2242 = vld [vmem:[#allocation4 + $0x18c] sm:$0xf]
    %v2243 = vld [vmem:[#allocation4 + $0x190] sm:$0xf]
    %v2244 = vld [vmem:[#allocation4 + $0x194] sm:$0xf]
    %v2245 = vld [vmem:[#allocation4 + $0x198] sm:$0xf]
    %v2246 = vld [vmem:[#allocation4 + $0x19c] sm:$0xf]
    %v2247 = vld [vmem:[#allocation4 + $0x1a0] sm:$0xf]
    %v2248 = vld [vmem:[#allocation4 + $0x1a4] sm:$0xf]
    %v2249 = vld [vmem:[#allocation4 + $0x1a8] sm:$0xf]
    %v2250 = vld [vmem:[#allocation4 + $0x1ac] sm:$0xf]
    %v2251 = vld [vmem:[#allocation4 + $0x1b0] sm:$0xf]
    %v2252 = vld [vmem:[#allocation4 + $0x1b4] sm:$0xf]
    %v2253 = vld [vmem:[#allocation4 + $0x1b8] sm:$0xf]
    %v2254 = vld [vmem:[#allocation4 + $0x1bc] sm:$0xf]
    %v2255 = vld [vmem:[#allocation4 + $0x1c0] sm:$0xf]
    %v2256 = vld [vmem:[#allocation4 + $0x1c4] sm:$0xf]
    %v2257 = vld [vmem:[#allocation4 + $0x1c8] sm:$0xf]
    %v2258 = vld [vmem:[#allocation4 + $0x1cc] sm:$0xf]
    %v2259 = vld [vmem:[#allocation4 + $0x1d0] sm:$0xf]
    %v2260 = vld [vmem:[#allocation4 + $0x1d4] sm:$0xf]
    %v2261 = vld [vmem:[#allocation4 + $0x1d8] sm:$0xf]
    %v2262 = vld [vmem:[#allocation4 + $0x1dc] sm:$0xf]
    %v2263 = vld [vmem:[#allocation4 + $0x1e0] sm:$0xf]
    %v2264 = vld [vmem:[#allocation4 + $0x1e4] sm:$0xf]
    %v2265 = vld [vmem:[#allocation4 + $0x1e8] sm:$0xf]
    %v2266 = vld [vmem:[#allocation4 + $0x1ec] sm:$0xf]
    %v2267 = vld [vmem:[#allocation4 + $0x1f0] sm:$0xf]
    %v2268 = vld [vmem:[#allocation4 + $0x1f4] sm:$0xf]
    %v2269 = vld [vmem:[#allocation4 + $0x1f8] sm:$0xf]
    %v2270 = vld [vmem:[#allocation4 + $0x1fc] sm:$0xf]
    %v2271 = vld [vmem:[%s4] sm:$0x1]
    %v2273 = vlaneseq
    %v2274 = vshrl.u32 %v2273, 7
    %v2275 = vsub.s32 0, %v2274
    %v2276 = vrot.slane %v2271, %v2275
    %v2406 = vunpack.c.l.b16 %v2143
    %v2407 = vunpack.c.l.b16 %v2144
    %v2408 = vunpack.c.l.b16 %v2145
    %v2409 = vunpack.c.l.b16 %v2146
    %v2410 = vunpack.c.l.b16 %v2147
    %v2411 = vunpack.c.l.b16 %v2148
    %v2412 = vunpack.c.l.b16 %v2149
    %v2413 = vunpack.c.l.b16 %v2150
    %v2414 = vunpack.c.l.b16 %v2151
    %v2415 = vunpack.c.l.b16 %v2152
    %v2416 = vunpack.c.l.b16 %v2153
    %v2417 = vunpack.c.l.b16 %v2154
    %v2418 = vunpack.c.l.b16 %v2155
    %v2419 = vunpack.c.l.b16 %v2156
    %v2420 = vunpack.c.l.b16 %v2157
    %v2421 = vunpack.c.l.b16 %v2158
    %v2422 = vunpack.c.l.b16 %v2159
    %v2423 = vunpack.c.l.b16 %v2160
    %v2424 = vunpack.c.l.b16 %v2161
    %v2425 = vunpack.c.l.b16 %v2162
    %v2426 = vunpack.c.l.b16 %v2163
    %v2427 = vunpack.c.l.b16 %v2164
    %v2428 = vunpack.c.l.b16 %v2165
    %v2429 = vunpack.c.l.b16 %v2166
    %v2430 = vunpack.c.l.b16 %v2167
    %v2431 = vunpack.c.l.b16 %v2168
    %v2432 = vunpack.c.l.b16 %v2169
    %v2433 = vunpack.c.l.b16 %v2170
    %v2434 = vunpack.c.l.b16 %v2171
    %v2435 = vunpack.c.l.b16 %v2172
    %v2436 = vunpack.c.l.b16 %v2173
    %v2437 = vunpack.c.l.b16 %v2174
    %v2438 = vunpack.c.l.b16 %v2175
    %v2439 = vunpack.c.l.b16 %v2176
    %v2440 = vunpack.c.l.b16 %v2177
    %v2441 = vunpack.c.l.b16 %v2178
    %v2442 = vunpack.c.l.b16 %v2179
    %v2443 = vunpack.c.l.b16 %v2180
    %v2444 = vunpack.c.l.b16 %v2181
    %v2445 = vunpack.c.l.b16 %v2182
    %v2446 = vunpack.c.l.b16 %v2183
    %v2447 = vunpack.c.l.b16 %v2184
    %v2448 = vunpack.c.l.b16 %v2185
    %v2449 = vunpack.c.l.b16 %v2186
    %v2450 = vunpack.c.l.b16 %v2187
    %v2451 = vunpack.c.l.b16 %v2188
    %v2452 = vunpack.c.l.b16 %v2189
    %v2453 = vunpack.c.l.b16 %v2190
    %v2454 = vunpack.c.l.b16 %v2191
    %v2455 = vunpack.c.l.b16 %v2192
    %v2456 = vunpack.c.l.b16 %v2193
    %v2457 = vunpack.c.l.b16 %v2194
    %v2458 = vunpack.c.l.b16 %v2195
    %v2459 = vunpack.c.l.b16 %v2196
    %v2460 = vunpack.c.l.b16 %v2197
    %v2461 = vunpack.c.l.b16 %v2198
    %v2462 = vunpack.c.l.b16 %v2199
    %v2463 = vunpack.c.l.b16 %v2200
    %v2464 = vunpack.c.l.b16 %v2201
    %v2465 = vunpack.c.l.b16 %v2202
    %v2466 = vunpack.c.l.b16 %v2203
    %v2467 = vunpack.c.l.b16 %v2204
    %v2468 = vunpack.c.l.b16 %v2205
    %v2469 = vunpack.c.l.b16 %v2206
    %v2470 = vunpack.c.l.b16 %v2207
    %v2471 = vunpack.c.l.b16 %v2208
    %v2472 = vunpack.c.l.b16 %v2209
    %v2473 = vunpack.c.l.b16 %v2210
    %v2474 = vunpack.c.l.b16 %v2211
    %v2475 = vunpack.c.l.b16 %v2212
    %v2476 = vunpack.c.l.b16 %v2213
    %v2477 = vunpack.c.l.b16 %v2214
    %v2478 = vunpack.c.l.b16 %v2215
    %v2479 = vunpack.c.l.b16 %v2216
    %v2480 = vunpack.c.l.b16 %v2217
    %v2481 = vunpack.c.l.b16 %v2218
    %v2482 = vunpack.c.l.b16 %v2219
    %v2483 = vunpack.c.l.b16 %v2220
    %v2484 = vunpack.c.l.b16 %v2221
    %v2485 = vunpack.c.l.b16 %v2222
    %v2486 = vunpack.c.l.b16 %v2223
    %v2487 = vunpack.c.l.b16 %v2224
    %v2488 = vunpack.c.l.b16 %v2225
    %v2489 = vunpack.c.l.b16 %v2226
    %v2490 = vunpack.c.l.b16 %v2227
    %v2491 = vunpack.c.l.b16 %v2228
    %v2492 = vunpack.c.l.b16 %v2229
    %v2493 = vunpack.c.l.b16 %v2230
    %v2494 = vunpack.c.l.b16 %v2231
    %v2495 = vunpack.c.l.b16 %v2232
    %v2496 = vunpack.c.l.b16 %v2233
    %v2497 = vunpack.c.l.b16 %v2234
    %v2498 = vunpack.c.l.b16 %v2235
    %v2499 = vunpack.c.l.b16 %v2236
    %v2500 = vunpack.c.l.b16 %v2237
    %v2501 = vunpack.c.l.b16 %v2238
    %v2502 = vunpack.c.l.b16 %v2239
    %v2503 = vunpack.c.l.b16 %v2240
    %v2504 = vunpack.c.l.b16 %v2241
    %v2505 = vunpack.c.l.b16 %v2242
    %v2506 = vunpack.c.l.b16 %v2243
    %v2507 = vunpack.c.l.b16 %v2244
    %v2508 = vunpack.c.l.b16 %v2245
    %v2509 = vunpack.c.l.b16 %v2246
    %v2510 = vunpack.c.l.b16 %v2247
    %v2511 = vunpack.c.l.b16 %v2248
    %v2512 = vunpack.c.l.b16 %v2249
    %v2513 = vunpack.c.l.b16 %v2250
    %v2514 = vunpack.c.l.b16 %v2251
    %v2515 = vunpack.c.l.b16 %v2252
    %v2516 = vunpack.c.l.b16 %v2253
    %v2517 = vunpack.c.l.b16 %v2254
    %v2518 = vunpack.c.l.b16 %v2255
    %v2519 = vunpack.c.l.b16 %v2256
    %v2520 = vunpack.c.l.b16 %v2257
    %v2521 = vunpack.c.l.b16 %v2258
    %v2522 = vunpack.c.l.b16 %v2259
    %v2523 = vunpack.c.l.b16 %v2260
    %v2524 = vunpack.c.l.b16 %v2261
    %v2525 = vunpack.c.l.b16 %v2262
    %v2526 = vunpack.c.l.b16 %v2263
    %v2527 = vunpack.c.l.b16 %v2264
    %v2528 = vunpack.c.l.b16 %v2265
    %v2529 = vunpack.c.l.b16 %v2266
    %v2530 = vunpack.c.l.b16 %v2267
    %v2531 = vunpack.c.l.b16 %v2268
    %v2532 = vunpack.c.l.b16 %v2269
    %v2533 = vunpack.c.l.b16 %v2270
    %v2534 = vpack.c.b16 %v2407, %v2406
    %v2535 = vpack.c.b16 %v2409, %v2408
    %v2536 = vpack.c.b16 %v2411, %v2410
    %v2537 = vpack.c.b16 %v2413, %v2412
    %v2538 = vpack.c.b16 %v2415, %v2414
    %v2539 = vpack.c.b16 %v2417, %v2416
    %v2540 = vpack.c.b16 %v2419, %v2418
    %v2541 = vpack.c.b16 %v2421, %v2420
    %v2542 = vpack.c.b16 %v2423, %v2422
    %v2543 = vpack.c.b16 %v2425, %v2424
    %v2544 = vpack.c.b16 %v2427, %v2426
    %v2545 = vpack.c.b16 %v2429, %v2428
    %v2546 = vpack.c.b16 %v2431, %v2430
    %v2547 = vpack.c.b16 %v2433, %v2432
    %v2548 = vpack.c.b16 %v2435, %v2434
    %v2549 = vpack.c.b16 %v2437, %v2436
    %v2550 = vpack.c.b16 %v2439, %v2438
    %v2551 = vpack.c.b16 %v2441, %v2440
    %v2552 = vpack.c.b16 %v2443, %v2442
    %v2553 = vpack.c.b16 %v2445, %v2444
    %v2554 = vpack.c.b16 %v2447, %v2446
    %v2555 = vpack.c.b16 %v2449, %v2448
    %v2556 = vpack.c.b16 %v2451, %v2450
    %v2557 = vpack.c.b16 %v2453, %v2452
    %v2558 = vpack.c.b16 %v2455, %v2454
    %v2559 = vpack.c.b16 %v2457, %v2456
    %v2560 = vpack.c.b16 %v2459, %v2458
    %v2561 = vpack.c.b16 %v2461, %v2460
    %v2562 = vpack.c.b16 %v2463, %v2462
    %v2563 = vpack.c.b16 %v2465, %v2464
    %v2564 = vpack.c.b16 %v2467, %v2466
    %v2565 = vpack.c.b16 %v2469, %v2468
    %v2566 = vpack.c.b16 %v2471, %v2470
    %v2567 = vpack.c.b16 %v2473, %v2472
    %v2568 = vpack.c.b16 %v2475, %v2474
    %v2569 = vpack.c.b16 %v2477, %v2476
    %v2570 = vpack.c.b16 %v2479, %v2478
    %v2571 = vpack.c.b16 %v2481, %v2480
    %v2572 = vpack.c.b16 %v2483, %v2482
    %v2573 = vpack.c.b16 %v2485, %v2484
    %v2574 = vpack.c.b16 %v2487, %v2486
    %v2575 = vpack.c.b16 %v2489, %v2488
    %v2576 = vpack.c.b16 %v2491, %v2490
    %v2577 = vpack.c.b16 %v2493, %v2492
    %v2578 = vpack.c.b16 %v2495, %v2494
    %v2579 = vpack.c.b16 %v2497, %v2496
    %v2580 = vpack.c.b16 %v2499, %v2498
    %v2581 = vpack.c.b16 %v2501, %v2500
    %v2582 = vpack.c.b16 %v2503, %v2502
    %v2583 = vpack.c.b16 %v2505, %v2504
    %v2584 = vpack.c.b16 %v2507, %v2506
    %v2585 = vpack.c.b16 %v2509, %v2508
    %v2586 = vpack.c.b16 %v2511, %v2510
    %v2587 = vpack.c.b16 %v2513, %v2512
    %v2588 = vpack.c.b16 %v2515, %v2514
    %v2589 = vpack.c.b16 %v2517, %v2516
    %v2590 = vpack.c.b16 %v2519, %v2518
    %v2591 = vpack.c.b16 %v2521, %v2520
    %v2592 = vpack.c.b16 %v2523, %v2522
    %v2593 = vpack.c.b16 %v2525, %v2524
    %v2594 = vpack.c.b16 %v2527, %v2526
    %v2595 = vpack.c.b16 %v2529, %v2528
    %v2596 = vpack.c.b16 %v2531, %v2530
    %v2597 = vpack.c.b16 %v2533, %v2532
    %2662 = vmatprep.subr.bf16.mxu0 0
    %2663 = vmatpush1.bf16.msra.mxu0 %v2534
    %2664 = vmatprep.subr.bf16.mxu0 0
    %2665 = vmatpush1.bf16.msra.mxu0 %v2535
    %2666 = vmatprep.subr.bf16.mxu0 0
    %2667 = vmatpush1.bf16.msra.mxu0 %v2536
    %2668 = vmatprep.subr.bf16.mxu0 0
    %2669 = vmatpush1.bf16.msra.mxu0 %v2537
    %2670 = vmatprep.subr.bf16.mxu0 0
    %2671 = vmatpush1.bf16.msra.mxu0 %v2538
    %2672 = vmatprep.subr.bf16.mxu0 0
    %2673 = vmatpush1.bf16.msra.mxu0 %v2539
    %2674 = vmatprep.subr.bf16.mxu0 0
    %2675 = vmatpush1.bf16.msra.mxu0 %v2540
    %2676 = vmatprep.subr.bf16.mxu0 0
    %2677 = vmatpush1.bf16.msra.mxu0 %v2541
    %2678 = vmatprep.subr.bf16.mxu0 0
    %2679 = vmatpush1.bf16.msra.mxu0 %v2542
    %2680 = vmatprep.subr.bf16.mxu0 0
    %2681 = vmatpush1.bf16.msra.mxu0 %v2543
    %2682 = vmatprep.subr.bf16.mxu0 0
    %2683 = vmatpush1.bf16.msra.mxu0 %v2544
    %2684 = vmatprep.subr.bf16.mxu0 0
    %2685 = vmatpush1.bf16.msra.mxu0 %v2545
    %2686 = vmatprep.subr.bf16.mxu0 0
    %2687 = vmatpush1.bf16.msra.mxu0 %v2546
    %2688 = vmatprep.subr.bf16.mxu0 0
    %2689 = vmatpush1.bf16.msra.mxu0 %v2547
    %2690 = vmatprep.subr.bf16.mxu0 0
    %2691 = vmatpush1.bf16.msra.mxu0 %v2548
    %2692 = vmatprep.subr.bf16.mxu0 0
    %2693 = vmatpush1.bf16.msra.mxu0 %v2549
    %2694 = vmatprep.mubr.bf16.mxu0 %v2136
    %2695 = vmatmul.mubr.bf16.gmra.mrb[0].mxu0 %v2135
    %v2696 = vpop.f32.mrb[0].mxu0
    %v2697 = vadd.f32 %v2276, %v2696
    %v2698 = vpop.f32.mrb[0].mxu0
    %v2699 = vpop.f32.mrb[0].mxu0
    %v2700 = vadd.f32 %v2276, %v2699
    %v2701 = vpop.f32.mrb[0].mxu0
    %2702 = vdwg.mxu0
    %2703 = vmatprep.subr.bf16.mxu0 0
    %2704 = vmatpush1.bf16.msra.mxu0 %v2550
    %2705 = vmatprep.subr.bf16.mxu0 0
    %2706 = vmatpush1.bf16.msra.mxu0 %v2551
    %2707 = vmatprep.subr.bf16.mxu0 0
    %2708 = vmatpush1.bf16.msra.mxu0 %v2552
    %2709 = vmatprep.subr.bf16.mxu0 0
    %2710 = vmatpush1.bf16.msra.mxu0 %v2553
    %2711 = vmatprep.subr.bf16.mxu0 0
    %2712 = vmatpush1.bf16.msra.mxu0 %v2554
    %2713 = vmatprep.subr.bf16.mxu0 0
    %2714 = vmatpush1.bf16.msra.mxu0 %v2555
    %2715 = vmatprep.subr.bf16.mxu0 0
    %2716 = vmatpush1.bf16.msra.mxu0 %v2556
    %2717 = vmatprep.subr.bf16.mxu0 0
    %2718 = vmatpush1.bf16.msra.mxu0 %v2557
    %2719 = vmatprep.subr.bf16.mxu0 0
    %2720 = vmatpush1.bf16.msra.mxu0 %v2558
    %2721 = vmatprep.subr.bf16.mxu0 0
    %2722 = vmatpush1.bf16.msra.mxu0 %v2559
    %2723 = vmatprep.subr.bf16.mxu0 0
    %2724 = vmatpush1.bf16.msra.mxu0 %v2560
    %2725 = vmatprep.subr.bf16.mxu0 0
    %2726 = vmatpush1.bf16.msra.mxu0 %v2561
    %2727 = vmatprep.subr.bf16.mxu0 0
    %2728 = vmatpush1.bf16.msra.mxu0 %v2562
    %2729 = vmatprep.subr.bf16.mxu0 0
    %2730 = vmatpush1.bf16.msra.mxu0 %v2563
    %2731 = vmatprep.subr.bf16.mxu0 0
    %2732 = vmatpush1.bf16.msra.mxu0 %v2564
    %2733 = vmatprep.subr.bf16.mxu0 0
    %2734 = vmatpush1.bf16.msra.mxu0 %v2565
    %2735 = vmatprep.mubr.bf16.mxu0 %v2138
    %2736 = vmatmul.mubr.bf16.gmra.mrb[0].mxu0 %v2137
    %v2737 = vpop.f32.mrb[0].mxu0
    %v2738 = vadd.f32 %v2697, %v2737
    %v2739 = vpop.f32.mrb[0].mxu0
    %v2740 = vpop.f32.mrb[0].mxu0
    %v2741 = vadd.f32 %v2700, %v2740
    %v2742 = vpop.f32.mrb[0].mxu0
    %2743 = vdwg.mxu0
    %2744 = vmatprep.subr.bf16.mxu0 0
    %2745 = vmatpush1.bf16.msra.mxu0 %v2566
    %2746 = vmatprep.subr.bf16.mxu0 0
    %2747 = vmatpush1.bf16.msra.mxu0 %v2567
    %2748 = vmatprep.subr.bf16.mxu0 0
    %2749 = vmatpush1.bf16.msra.mxu0 %v2568
    %2750 = vmatprep.subr.bf16.mxu0 0
    %2751 = vmatpush1.bf16.msra.mxu0 %v2569
    %2752 = vmatprep.subr.bf16.mxu0 0
    %2753 = vmatpush1.bf16.msra.mxu0 %v2570
    %2754 = vmatprep.subr.bf16.mxu0 0
    %2755 = vmatpush1.bf16.msra.mxu0 %v2571
    %2756 = vmatprep.subr.bf16.mxu0 0
    %2757 = vmatpush1.bf16.msra.mxu0 %v2572
    %2758 = vmatprep.subr.bf16.mxu0 0
    %2759 = vmatpush1.bf16.msra.mxu0 %v2573
    %2760 = vmatprep.subr.bf16.mxu0 0
    %2761 = vmatpush1.bf16.msra.mxu0 %v2574
    %2762 = vmatprep.subr.bf16.mxu0 0
    %2763 = vmatpush1.bf16.msra.mxu0 %v2575
    %2764 = vmatprep.subr.bf16.mxu0 0
    %2765 = vmatpush1.bf16.msra.mxu0 %v2576
    %2766 = vmatprep.subr.bf16.mxu0 0
    %2767 = vmatpush1.bf16.msra.mxu0 %v2577
    %2768 = vmatprep.subr.bf16.mxu0 0
    %2769 = vmatpush1.bf16.msra.mxu0 %v2578
    %2770 = vmatprep.subr.bf16.mxu0 0
    %2771 = vmatpush1.bf16.msra.mxu0 %v2579
    %2772 = vmatprep.subr.bf16.mxu0 0
    %2773 = vmatpush1.bf16.msra.mxu0 %v2580
    %2774 = vmatprep.subr.bf16.mxu0 0
    %2775 = vmatpush1.bf16.msra.mxu0 %v2581
    %2776 = vmatprep.mubr.bf16.mxu0 %v2140
    %2777 = vmatmul.mubr.bf16.gmra.mrb[0].mxu0 %v2139
    %v2778 = vpop.f32.mrb[0].mxu0
    %v2779 = vadd.f32 %v2738, %v2778
    %v2780 = vpop.f32.mrb[0].mxu0
    %v2781 = vpop.f32.mrb[0].mxu0
    %v2782 = vadd.f32 %v2741, %v2781
    %v2783 = vpop.f32.mrb[0].mxu0
    %2784 = vdwg.mxu0
    %2785 = vmatprep.subr.bf16.mxu0 0
    %2786 = vmatpush1.bf16.msra.mxu0 %v2582
    %2787 = vmatprep.subr.bf16.mxu0 0
    %2788 = vmatpush1.bf16.msra.mxu0 %v2583
    %2789 = vmatprep.subr.bf16.mxu0 0
    %2790 = vmatpush1.bf16.msra.mxu0 %v2584
    %2791 = vmatprep.subr.bf16.mxu0 0
    %2792 = vmatpush1.bf16.msra.mxu0 %v2585
    %2793 = vmatprep.subr.bf16.mxu0 0
    %2794 = vmatpush1.bf16.msra.mxu0 %v2586
    %2795 = vmatprep.subr.bf16.mxu0 0
    %2796 = vmatpush1.bf16.msra.mxu0 %v2587
    %2797 = vmatprep.subr.bf16.mxu0 0
    %2798 = vmatpush1.bf16.msra.mxu0 %v2588
    %2799 = vmatprep.subr.bf16.mxu0 0
    %2800 = vmatpush1.bf16.msra.mxu0 %v2589
    %2801 = vmatprep.subr.bf16.mxu0 0
    %2802 = vmatpush1.bf16.msra.mxu0 %v2590
    %2803 = vmatprep.subr.bf16.mxu0 0
    %2804 = vmatpush1.bf16.msra.mxu0 %v2591
    %2805 = vmatprep.subr.bf16.mxu0 0
    %2806 = vmatpush1.bf16.msra.mxu0 %v2592
    %2807 = vmatprep.subr.bf16.mxu0 0
    %2808 = vmatpush1.bf16.msra.mxu0 %v2593
    %2809 = vmatprep.subr.bf16.mxu0 0
    %2810 = vmatpush1.bf16.msra.mxu0 %v2594
    %2811 = vmatprep.subr.bf16.mxu0 0
    %2812 = vmatpush1.bf16.msra.mxu0 %v2595
    %2813 = vmatprep.subr.bf16.mxu0 0
    %2814 = vmatpush1.bf16.msra.mxu0 %v2596
    %2815 = vmatprep.subr.bf16.mxu0 0
    %2816 = vmatpush1.bf16.msra.mxu0 %v2597
    %2817 = vmatprep.mubr.bf16.mxu0 %v2142
    %2818 = vmatmul.mubr.bf16.gmra.mrb[0].mxu0 %v2141
    %v2819 = vpop.f32.mrb[0].mxu0
    %v2820 = vadd.f32 %v2779, %v2819
    %v2821 = vpop.f32.mrb[0].mxu0
    %v2822 = vpop.f32.mrb[0].mxu0
    %v2823 = vadd.f32 %v2782, %v2822
    %v2824 = vpop.f32.mrb[0].mxu0
    %2825 = vdwg.mxu0
    %2826 = vmax.xlane.f32.xlu0 %v2820
    %v2827 = vpop.xlane.xlu0 %2826
    %2828 = vmax.xlane.f32.xlu0 %v2823
    %v2829 = vpop.xlane.xlu0 %2828
    %v2830 = vsub.f32 %v2820, %v2827
    %v2831 = vsub.f32 %v2823, %v2829
    %v2832 = vmul.f32 %v2830, 1.442695
    %v2833 = vpow.pop %v2832
    %v2834 = vmul.f32 %v2831, 1.442695
    %v2835 = vpow.pop %v2834
    %2836 = vadd.xlane.f32.xlu0 %v2833
    %v2837 = vpop.xlane.xlu0 %2836
    %2838 = vadd.xlane.f32.xlu0 %v2835
    %v2839 = vpop.xlane.xlu0 %2838
    %v2840 = vrcp.pop %v2837
    %v2841 = vrcp.pop %v2839
    %v2842 = vmul.f32 %v2833, %v2840
    %v2843 = vmul.f32 %v2835, %v2841
    %v2844 = vpack.c.bf16 %v2843, %v2842
    %v2846 = vunpack.c.l.b16 %v2844
    %v2847 = vunpack.c.h.b16 %v2844
    %v2848 = vpack.c.b16 %v2846, %v2846
    %v2849 = vpack.c.b16 %v2847, %v2847
    %2852 = vst [vmem:[%s5] sm:$0xf] %v2848
    %2853 = vst [vmem:[%s5 + $0x4] sm:$0xf] %v2849
    // Predicated region
    $region30: #{classifier_forward.1} parent=1 // pred_check
      _
    $region31: #{classifier_forward.1} parent=1 // pred_check_branch
      %2855 = sbr.rel (0) target = $region33
    $region32: #{classifier_forward.1} parent=1 // pred_region
      _
    $region33: #{classifier_forward.1} parent=1 // pred_fallthru
      _
    // Predicated region
    $region34: #{classifier_forward.1} parent=1 // pred_check
      _
    $region35: #{classifier_forward.1} parent=1 // pred_check_branch
      %2857 = sbr.rel (0) target = $region37
    $region36: #{classifier_forward.1} parent=1 // pred_region
      _
    $region37: #{classifier_forward.1} parent=1 // pred_fallthru
      _
    %2858 = vsyncpa [#allocation3], 1
    %2859 = vsyncpa [#allocation5], 1

</llo_original>
